<compile_context>
chip_gen: v7x
topology: tpu7x:2x2x1
jax: 0.10.0
libtpu: 0.0.40
codegen_flags: <defaults>
</compile_context>

<pallas_src>
import functools

import numpy as np
import jax
import jax.numpy as jnp
from jax import lax
from jax.experimental import pallas as pl
from jax.experimental.pallas import tpu as pltpu


# ----------------------------- helpers -----------------------------

def _pick_tile(size, target, align):
    """Largest block dim <= target that is a multiple of `align` and divides `size`.
    Falls back to the full dimension (always a legal block)."""
    if size <= target:
        return size
    t = (min(size, target) // align) * align
    while t >= align:
        if size % t == 0:
            return t
        t -= align
    return size  # TODO(synk): pad + cdiv grid for awkward sizes instead of full-dim fallback.


# ----------------------------- fused qkv projection -----------------------------

def _qkv_kernel(x_ref, wq_ref, wk_ref, wv_ref, q_ref, k_ref, v_ref,
                acc_q, acc_k, acc_v):
    @pl.when(pl.program_id(1) == 0)
    def _():
        acc_q[...] = jnp.zeros_like(acc_q)
        acc_k[...] = jnp.zeros_like(acc_k)
        acc_v[...] = jnp.zeros_like(acc_v)

    xb = x_ref[...].astype(jnp.bfloat16)   # cast in-kernel: only f32 x is DMA'd once
    acc_q[...] += jnp.dot(xb, wq_ref[...], preferred_element_type=jnp.float32)
    acc_k[...] += jnp.dot(xb, wk_ref[...], preferred_element_type=jnp.float32)
    acc_v[...] += jnp.dot(xb, wv_ref[...], preferred_element_type=jnp.float32)

    @pl.when(pl.program_id(1) == pl.num_programs(1) - 1)
    def _():
        q_ref[...] = acc_q[...].astype(q_ref.dtype)
        k_ref[...] = acc_k[...].astype(k_ref.dtype)
        v_ref[...] = acc_v[...].astype(v_ref.dtype)


def _qkv_projection(x, w_q, w_k, w_v, *, tm=512, tk=512):
    """(M, K) f32 x times three (K, inner) bf16 weights -> three (M, inner) bf16 outputs."""
    M, K = x.shape
    inner = w_q.shape[1]
    tm = _pick_tile(M, tm, 16)
    tk = _pick_tile(K, tk, 128)

    w_spec = pl.BlockSpec((tk, inner), lambda i, kk: (kk, 0))
    out_spec = pl.BlockSpec((tm, inner), lambda i, kk: (i, 0))
    out_sds = jax.ShapeDtypeStruct((M, inner), jnp.bfloat16)

    return pl.pallas_call(
        _qkv_kernel,
        out_shape=(out_sds, out_sds, out_sds),
        grid=(M // tm, K // tk),
        in_specs=[
            pl.BlockSpec((tm, tk), lambda i, kk: (i, kk)),
            w_spec, w_spec, w_spec,
        ],
        out_specs=(out_spec, out_spec, out_spec),
        scratch_shapes=[pltpu.VMEM((tm, inner), jnp.float32)] * 3,
        compiler_params=pltpu.CompilerParams(
            dimension_semantics=("parallel", "arbitrary")),
    )(x, w_q, w_k, w_v)


# ----------------------------- fused attention + out-projection kernel -----------------------------

def _attn_kernel(q_ref, k_ref, v_ref, spd_ref, wo_ref, bo_ref, o_ref, *,
                 heads, dim_head):
    # One grid step = (batch element, query tile); all heads handled here.
    qb = q_ref[0]          # (tq, inner) bf16, pre-scaled by dim_head**-0.5 via w_q
    kb = k_ref[0]          # (n,  inner) bf16
    vb = v_ref[0]          # (n,  inner) bf16
    spd = spd_ref[...]     # (tq, n) f32 row-tile of the (n, n) prior
    tq = qb.shape[0]
    dim = wo_ref.shape[1]

    acc = jnp.zeros((tq, dim), jnp.float32)
    # TODO(synk): for heads >~ 8, switch to a lax.fori_loop over heads (bounded live
    # ranges) with a head-major q/k/v layout; heads=4 unrolled is fine here.
    for h in range(heads):
        sl = slice(h * dim_head, (h + 1) * dim_head)
        q_h = qb[:, sl]    # (tq, d) bf16
        k_h = kb[:, sl]    # (n,  d) bf16
        v_h = vb[:, sl]    # (n,  d) bf16

        # dots = q_h @ k_h^T without materializing a transpose (contract last dims).
        dots = lax.dot_general(q_h, k_h, (((1,), (1,)), ((), ())),
                               preferred_element_type=jnp.float32)      # (tq, n)

        # torch.norm(dots, p=2, dim=-1, keepdim=True)
        dots_norm = jnp.sqrt(jnp.sum(dots * dots, axis=-1, keepdims=True))

        # F.normalize(dots*spd, p=2, dim=-1) == t * rsqrt(max(sum(t^2), eps^2)), eps=1e-12
        ds = dots * spd
        inv_ds_norm = lax.rsqrt(
            jnp.maximum(jnp.sum(ds * ds, axis=-1, keepdims=True), 1e-24))

        logits = dots + ds * (inv_ds_norm * dots_norm)

        # softmax along the key axis (f32); denominator reciprocal on the EUP.
        m = jnp.max(logits, axis=-1, keepdims=True)
        e = jnp.exp(logits - m)
        attn = e * pl.reciprocal(jnp.sum(e, axis=-1, keepdims=True), approx=True)

        # nn.Dropout(p=0.0) is identity.  PV matmul + fused per-head slice of the
        # output projection (head drop-mask rescale is pre-folded into wo rows).
        out_h = jnp.dot(attn.astype(vb.dtype), v_h,
                        preferred_element_type=jnp.float32)             # (tq, d) f32
        acc = acc + jnp.dot(out_h.astype(jnp.bfloat16), wo_ref[sl, :],
                            preferred_element_type=jnp.float32)         # (tq, dim)

    o_ref[0] = (acc + bo_ref[...]).astype(o_ref.dtype)


def _attention(q, k, v, spd, w_out, b_out, *, heads, dim_head, tq_target=256):
    b, n, inner = q.shape
    dim = w_out.shape[1]
    tq = _pick_tile(n, tq_target, 16)
    kernel = functools.partial(_attn_kernel, heads=heads, dim_head=dim_head)

    # TODO(synk): for very long n, also tile the key/value axis flash-style (online
    # softmax + running sums-of-squares, spd tiled (tq, tk)) and raise
    # vmem_limit_bytes explicitly so k/v + (tq, n) temporaries fit v7x's 64 MiB VMEM.
    return pl.pallas_call(
        kernel,
        out_shape=jax.ShapeDtypeStruct((b, n, dim), jnp.float32),
        grid=(b, n // tq),
        in_specs=[
            pl.BlockSpec((1, tq, inner), lambda bi, qi: (bi, qi, 0)),   # q tile
            pl.BlockSpec((1, n, inner), lambda bi, qi: (bi, 0, 0)),     # k (all keys)
            pl.BlockSpec((1, n, inner), lambda bi, qi: (bi, 0, 0)),     # v
            pl.BlockSpec((tq, n), lambda bi, qi: (qi, 0)),              # spd row tile
            pl.BlockSpec((inner, dim), lambda bi, qi: (0, 0)),          # w_out (VMEM resident)
            pl.BlockSpec((1, dim), lambda bi, qi: (0, 0)),              # b_out
        ],
        out_specs=pl.BlockSpec((1, tq, dim), lambda bi, qi: (bi, qi, 0)),
        compiler_params=pltpu.CompilerParams(
            dimension_semantics=("parallel", "parallel")),
    )(q, k, v, spd, w_out, b_out)


# ----------------------------- full forward -----------------------------

def attention_spd_forward(x, spd, head_scale, w_qkv, w_out, b_out, *, heads, dim_head):
    b, n, dim = x.shape
    inner = heads * dim_head
    scale = dim_head ** -0.5

    # Weight-side folds (tiny, done once under jit):
    #   * attention scale into w_q columns,
    #   * per-head binomial drop-mask rescale into w_out rows.
    w_q = (w_qkv[:, :inner] * scale).astype(jnp.bfloat16)
    w_k = w_qkv[:, inner:2 * inner].astype(jnp.bfloat16)
    w_v = w_qkv[:, 2 * inner:].astype(jnp.bfloat16)
    hs_vec = jnp.repeat(head_scale.astype(jnp.float32), dim_head)        # (inner,)
    w_out_s = (w_out.astype(jnp.float32) * hs_vec[:, None]).astype(jnp.bfloat16)

    # Fused qkv projection: x read once, q/k/v written once each (bf16, natural layout).
    q, k, v = _qkv_projection(x.reshape(b * n, dim), w_q, w_k, w_v)
    q = q.reshape(b, n, inner)
    k = k.reshape(b, n, inner)
    v = v.reshape(b, n, inner)

    # Fused attention + to_out (Linear(inner, dim) + bias; Dropout(0.0) = identity).
    return _attention(q, k, v, spd.astype(jnp.float32), w_out_s,
                      b_out.reshape(1, dim).astype(jnp.float32),
                      heads=heads, dim_head=dim_head)


# ----------------------------- pure-JAX reference -----------------------------

def _reference(x, spd, head_scale, w_qkv, w_out, b_out, *, heads, dim_head):
    b, n, dim = x.shape
    inner = heads * dim_head
    qkv = x @ w_qkv
    q, k, v = jnp.split(qkv, 3, axis=-1)
    def split_heads(t):
        return t.reshape(b, n, heads, dim_head).transpose(0, 2, 1, 3)
    q, k, v = map(split_heads, (q, k, v))
    dots = jnp.einsum('bhqd,bhkd->bhqk', q, k) * (dim_head ** -0.5)
    dn = jnp.sqrt(jnp.sum(dots * dots, axis=-1, keepdims=True))
    ds = dots * spd
    ds_n = ds / jnp.maximum(jnp.sqrt(jnp.sum(ds * ds, axis=-1, keepdims=True)), 1e-12)
    attn = jax.nn.softmax(dots + ds_n * dn, axis=-1)
    attn = attn * head_scale[None, :, None, None]
    out = jnp.einsum('bhqk,bhkd->bhqd', attn, v)
    out = out.transpose(0, 2, 1, 3).reshape(b, n, inner)
    return out @ w_out + b_out[None, None, :]


# ----------------------------- driver -----------------------------

if __name__ == "__main__":
    B, N, DIM = 2, 8, 32
    HEADS, DIM_HEAD = 4, 16
    INNER = HEADS * DIM_HEAD
    P_DROP_HEAD = 0.5      # the `p` argument of forward()

    key = jax.random.PRNGKey(0)
    kx, kspd, kqkv, kout, kbias = jax.random.split(key, 5)
    x = jax.random.normal(kx, (B, N, DIM), dtype=jnp.float32)
    spd = jax.random.uniform(kspd, (N, N), dtype=jnp.float32)

    # deterministic parameter init (nn.Linear shapes; JAX layout = (in, out))
    w_qkv = 0.05 * jax.random.normal(kqkv, (DIM, 3 * INNER), dtype=jnp.float32)
    w_out = 0.05 * jax.random.normal(kout, (INNER, DIM), dtype=jnp.float32)
    b_out = 0.05 * jax.random.normal(kbias, (DIM,), dtype=jnp.float32)

    # Host-side per-head binomial mask exactly like the PyTorch code (numpy RNG),
    # folded into one scalar per head: a[h] * heads / sum(a); same for every batch.
    np.random.seed(0)
    a = np.random.binomial(1, 1.0 - P_DROP_HEAD, size=HEADS)
    while np.sum(a) == 0:
        a = np.random.binomial(1, 1.0 - P_DROP_HEAD, size=HEADS)
    head_scale = jnp.asarray(a.astype(np.float32) * HEADS / np.sum(a))   # (HEADS,)

    fwd = jax.jit(functools.partial(attention_spd_forward, heads=HEADS, dim_head=DIM_HEAD))
    out = fwd(x, spd, head_scale, w_qkv, w_out, b_out)
    out = jax.block_until_ready(out)

    assert out.shape == (B, N, DIM) and out.dtype == jnp.float32
    ref = _reference(x, spd, head_scale, w_qkv, w_out, b_out, heads=HEADS, dim_head=DIM_HEAD)
    assert bool(jnp.allclose(out, ref, atol=5e-2, rtol=5e-2)), "mismatch vs f32 reference"
    print("KERNEL_OK")
</pallas_src>

<mosaic_0001>
module attributes {stable_mosaic.version = 11 : i64} {
  func.func @_qkv_kernel(%arg0: i32, %arg1: i32, %arg2: memref<16x32xf32, #tpu.memory_space<vmem>>, %arg3: memref<32x64xbf16, #tpu.memory_space<vmem>>, %arg4: memref<32x64xbf16, #tpu.memory_space<vmem>>, %arg5: memref<32x64xbf16, #tpu.memory_space<vmem>>, %arg6: memref<16x64xbf16, #tpu.memory_space<vmem>>, %arg7: memref<16x64xbf16, #tpu.memory_space<vmem>>, %arg8: memref<16x64xbf16, #tpu.memory_space<vmem>>, %arg9: memref<16x64xf32, #tpu.memory_space<vmem>>, %arg10: memref<16x64xf32, #tpu.memory_space<vmem>>, %arg11: memref<16x64xf32, #tpu.memory_space<vmem>>) attributes {dimension_semantics = [#tpu.dimension_semantics<parallel>, #tpu.dimension_semantics<arbitrary>], iteration_bounds = array<i64: 1, 1>, scalar_prefetch = 0 : i64, scratch_operands = 3 : i64, tpu.core_type = #tpu.core_type<tc>, window_params = [{transform_indices = @transform_0, window_bounds = array<i64: 16, 32>}, {transform_indices = @transform_1, window_bounds = array<i64: 32, 64>}, {transform_indices = @transform_2, window_bounds = array<i64: 32, 64>}, {transform_indices = @transform_3, window_bounds = array<i64: 32, 64>}, {transform_indices = @transform_4, window_bounds = array<i64: 16, 64>}, {transform_indices = @transform_5, window_bounds = array<i64: 16, 64>}, {transform_indices = @transform_6, window_bounds = array<i64: 16, 64>}]} {
    %c0_i32 = arith.constant 0 : i32
    %0 = arith.cmpi eq, %arg1, %c0_i32 : i32
    %1 = arith.extui %0 : i1 to i32
    %c0_i32_0 = arith.constant 0 : i32
    %2 = arith.cmpi ne, %1, %c0_i32_0 : i32
    scf.if %2 {
      %cst_24 = arith.constant 0.000000e+00 : f32
      %23 = vector.broadcast %cst_24 : f32 to vector<16x64xf32>
      %c0_25 = arith.constant 0 : index
      %c0_26 = arith.constant 0 : index
      %24 = vector.load %arg9[%c0_25, %c0_26] : memref<16x64xf32, #tpu.memory_space<vmem>>, vector<16x64xf32>
      tpu.vector_store %arg9[%c0_25, %c0_26], %23 {strides = array<i32>} : memref<16x64xf32, #tpu.memory_space<vmem>>, vector<16x64xf32>,
      %cst_27 = arith.constant 0.000000e+00 : f32
      %25 = vector.broadcast %cst_27 : f32 to vector<16x64xf32>
      %c0_28 = arith.constant 0 : index
      %c0_29 = arith.constant 0 : index
      %26 = vector.load %arg10[%c0_28, %c0_29] : memref<16x64xf32, #tpu.memory_space<vmem>>, vector<16x64xf32>
      tpu.vector_store %arg10[%c0_28, %c0_29], %25 {strides = array<i32>} : memref<16x64xf32, #tpu.memory_space<vmem>>, vector<16x64xf32>,
      %cst_30 = arith.constant 0.000000e+00 : f32
      %27 = vector.broadcast %cst_30 : f32 to vector<16x64xf32>
      %c0_31 = arith.constant 0 : index
      %c0_32 = arith.constant 0 : index
      %28 = vector.load %arg11[%c0_31, %c0_32] : memref<16x64xf32, #tpu.memory_space<vmem>>, vector<16x64xf32>
      tpu.vector_store %arg11[%c0_31, %c0_32], %27 {strides = array<i32>} : memref<16x64xf32, #tpu.memory_space<vmem>>, vector<16x64xf32>,
    } else {
    }
    %c0 = arith.constant 0 : index
    %c0_1 = arith.constant 0 : index
    %3 = vector.load %arg2[%c0, %c0_1] : memref<16x32xf32, #tpu.memory_space<vmem>>, vector<16x32xf32>
    %4 = arith.truncf %3 : vector<16x32xf32> to vector<16x32xbf16>
    %c0_2 = arith.constant 0 : index
    %c0_3 = arith.constant 0 : index
    %5 = vector.load %arg9[%c0_2, %c0_3] : memref<16x64xf32, #tpu.memory_space<vmem>>, vector<16x64xf32>
    %c0_4 = arith.constant 0 : index
    %c0_5 = arith.constant 0 : index
    %6 = vector.load %arg3[%c0_4, %c0_5] : memref<32x64xbf16, #tpu.memory_space<vmem>>, vector<32x64xbf16>
    %cst = arith.constant dense<0.000000e+00> : vector<16x64xf32>
    %7 = tpu.matmul %4, %6, %cst {dimension_numbers = #tpu.dot_dimension_numbers<[1], [0], [0], [1], [0, 0, 1, 1], [], []>} : vector<16x32xbf16>, vector<32x64xbf16>, vector<16x64xf32> -> vector<16x64xf32>
    %8 = arith.addf %5, %7 : vector<16x64xf32>
    %c0_6 = arith.constant 0 : index
    %c0_7 = arith.constant 0 : index
    %9 = vector.load %arg9[%c0_6, %c0_7] : memref<16x64xf32, #tpu.memory_space<vmem>>, vector<16x64xf32>
    tpu.vector_store %arg9[%c0_6, %c0_7], %8 {strides = array<i32>} : memref<16x64xf32, #tpu.memory_space<vmem>>, vector<16x64xf32>,
    %c0_8 = arith.constant 0 : index
    %c0_9 = arith.constant 0 : index
    %10 = vector.load %arg10[%c0_8, %c0_9] : memref<16x64xf32, #tpu.memory_space<vmem>>, vector<16x64xf32>
    %c0_10 = arith.constant 0 : index
    %c0_11 = arith.constant 0 : index
    %11 = vector.load %arg4[%c0_10, %c0_11] : memref<32x64xbf16, #tpu.memory_space<vmem>>, vector<32x64xbf16>
    %cst_12 = arith.constant dense<0.000000e+00> : vector<16x64xf32>
    %12 = tpu.matmul %4, %11, %cst_12 {dimension_numbers = #tpu.dot_dimension_numbers<[1], [0], [0], [1], [0, 0, 1, 1], [], []>} : vector<16x32xbf16>, vector<32x64xbf16>, vector<16x64xf32> -> vector<16x64xf32>
    %13 = arith.addf %10, %12 : vector<16x64xf32>
    %c0_13 = arith.constant 0 : index
    %c0_14 = arith.constant 0 : index
    %14 = vector.load %arg10[%c0_13, %c0_14] : memref<16x64xf32, #tpu.memory_space<vmem>>, vector<16x64xf32>
    tpu.vector_store %arg10[%c0_13, %c0_14], %13 {strides = array<i32>} : memref<16x64xf32, #tpu.memory_space<vmem>>, vector<16x64xf32>,
    %c0_15 = arith.constant 0 : index
    %c0_16 = arith.constant 0 : index
    %15 = vector.load %arg11[%c0_15, %c0_16] : memref<16x64xf32, #tpu.memory_space<vmem>>, vector<16x64xf32>
    %c0_17 = arith.constant 0 : index
    %c0_18 = arith.constant 0 : index
    %16 = vector.load %arg5[%c0_17, %c0_18] : memref<32x64xbf16, #tpu.memory_space<vmem>>, vector<32x64xbf16>
    %cst_19 = arith.constant dense<0.000000e+00> : vector<16x64xf32>
    %17 = tpu.matmul %4, %16, %cst_19 {dimension_numbers = #tpu.dot_dimension_numbers<[1], [0], [0], [1], [0, 0, 1, 1], [], []>} : vector<16x32xbf16>, vector<32x64xbf16>, vector<16x64xf32> -> vector<16x64xf32>
    %18 = arith.addf %15, %17 : vector<16x64xf32>
    %c0_20 = arith.constant 0 : index
    %c0_21 = arith.constant 0 : index
    %19 = vector.load %arg11[%c0_20, %c0_21] : memref<16x64xf32, #tpu.memory_space<vmem>>, vector<16x64xf32>
    tpu.vector_store %arg11[%c0_20, %c0_21], %18 {strides = array<i32>} : memref<16x64xf32, #tpu.memory_space<vmem>>, vector<16x64xf32>,
    %c0_i32_22 = arith.constant 0 : i32
    %20 = arith.cmpi eq, %arg1, %c0_i32_22 : i32
    %21 = arith.extui %20 : i1 to i32
    %c0_i32_23 = arith.constant 0 : i32
    %22 = arith.cmpi ne, %21, %c0_i32_23 : i32
    scf.if %22 {
      %c0_24 = arith.constant 0 : index
      %c0_25 = arith.constant 0 : index
      %23 = vector.load %arg9[%c0_24, %c0_25] : memref<16x64xf32, #tpu.memory_space<vmem>>, vector<16x64xf32>
      %24 = arith.truncf %23 : vector<16x64xf32> to vector<16x64xbf16>
      %c0_26 = arith.constant 0 : index
      %c0_27 = arith.constant 0 : index
      %25 = vector.load %arg6[%c0_26, %c0_27] : memref<16x64xbf16, #tpu.memory_space<vmem>>, vector<16x64xbf16>
      tpu.vector_store %arg6[%c0_26, %c0_27], %24 {strides = array<i32>} : memref<16x64xbf16, #tpu.memory_space<vmem>>, vector<16x64xbf16>,
      %c0_28 = arith.constant 0 : index
      %c0_29 = arith.constant 0 : index
      %26 = vector.load %arg10[%c0_28, %c0_29] : memref<16x64xf32, #tpu.memory_space<vmem>>, vector<16x64xf32>
      %27 = arith.truncf %26 : vector<16x64xf32> to vector<16x64xbf16>
      %c0_30 = arith.constant 0 : index
      %c0_31 = arith.constant 0 : index
      %28 = vector.load %arg7[%c0_30, %c0_31] : memref<16x64xbf16, #tpu.memory_space<vmem>>, vector<16x64xbf16>
      tpu.vector_store %arg7[%c0_30, %c0_31], %27 {strides = array<i32>} : memref<16x64xbf16, #tpu.memory_space<vmem>>, vector<16x64xbf16>,
      %c0_32 = arith.constant 0 : index
      %c0_33 = arith.constant 0 : index
      %29 = vector.load %arg11[%c0_32, %c0_33] : memref<16x64xf32, #tpu.memory_space<vmem>>, vector<16x64xf32>
      %30 = arith.truncf %29 : vector<16x64xf32> to vector<16x64xbf16>
      %c0_34 = arith.constant 0 : index
      %c0_35 = arith.constant 0 : index
      %31 = vector.load %arg8[%c0_34, %c0_35] : memref<16x64xbf16, #tpu.memory_space<vmem>>, vector<16x64xbf16>
      tpu.vector_store %arg8[%c0_34, %c0_35], %30 {strides = array<i32>} : memref<16x64xbf16, #tpu.memory_space<vmem>>, vector<16x64xbf16>,
    } else {
    }
    return
  }
  func.func @transform_0(%arg0: i32, %arg1: i32) -> (i32, i32) {
    %c0_i32 = arith.constant 0 : i32
    return %arg0, %arg1 : i32, i32
  }
  func.func @transform_1(%arg0: i32, %arg1: i32) -> (i32, i32) {
    %c0_i32 = arith.constant 0 : i32
    %c0_i32_0 = arith.constant 0 : i32
    return %arg1, %c0_i32 : i32, i32
  }
  func.func @transform_2(%arg0: i32, %arg1: i32) -> (i32, i32) {
    %c0_i32 = arith.constant 0 : i32
    %c0_i32_0 = arith.constant 0 : i32
    return %arg1, %c0_i32 : i32, i32
  }
  func.func @transform_3(%arg0: i32, %arg1: i32) -> (i32, i32) {
    %c0_i32 = arith.constant 0 : i32
    %c0_i32_0 = arith.constant 0 : i32
    return %arg1, %c0_i32 : i32, i32
  }
  func.func @transform_4(%arg0: i32, %arg1: i32) -> (i32, i32) {
    %c0_i32 = arith.constant 0 : i32
    %c0_i32_0 = arith.constant 0 : i32
    return %arg0, %c0_i32 : i32, i32
  }
  func.func @transform_5(%arg0: i32, %arg1: i32) -> (i32, i32) {
    %c0_i32 = arith.constant 0 : i32
    %c0_i32_0 = arith.constant 0 : i32
    return %arg0, %c0_i32 : i32, i32
  }
  func.func @transform_6(%arg0: i32, %arg1: i32) -> (i32, i32) {
    %c0_i32 = arith.constant 0 : i32
    %c0_i32_0 = arith.constant 0 : i32
    return %arg0, %c0_i32 : i32, i32
  }
}

module attributes {stable_mosaic.version = 11 : i64} {
  func.func @_attn_kernel(%arg0: i32, %arg1: i32, %arg2: memref<1x8x64xbf16, #tpu.memory_space<vmem>>, %arg3: memref<1x8x64xbf16, #tpu.memory_space<vmem>>, %arg4: memref<1x8x64xbf16, #tpu.memory_space<vmem>>, %arg5: memref<8x8xf32, #tpu.memory_space<vmem>>, %arg6: memref<64x32xbf16, #tpu.memory_space<vmem>>, %arg7: memref<1x32xf32, #tpu.memory_space<vmem>>, %arg8: memref<1x8x32xf32, #tpu.memory_space<vmem>>) attributes {dimension_semantics = [#tpu.dimension_semantics<parallel>, #tpu.dimension_semantics<parallel>], iteration_bounds = array<i64: 2, 1>, scalar_prefetch = 0 : i64, scratch_operands = 0 : i64, tpu.core_type = #tpu.core_type<tc>, window_params = [{transform_indices = @transform_0, window_bounds = array<i64: 1, 8, 64>}, {transform_indices = @transform_1, window_bounds = array<i64: 1, 8, 64>}, {transform_indices = @transform_2, window_bounds = array<i64: 1, 8, 64>}, {transform_indices = @transform_3, window_bounds = array<i64: 8, 8>}, {pipeline_mode = #tpu.pipeline_mode<synchronous>, transform_indices = @transform_4, window_bounds = array<i64: 64, 32>}, {pipeline_mode = #tpu.pipeline_mode<synchronous>, transform_indices = @transform_5, window_bounds = array<i64: 1, 32>}, {transform_indices = @transform_6, window_bounds = array<i64: 1, 8, 32>}]} {
    %c0 = arith.constant 0 : index
    %c0_0 = arith.constant 0 : index
    %c0_1 = arith.constant 0 : index
    %0 = vector.load %arg2[%c0, %c0_0, %c0_1] : memref<1x8x64xbf16, #tpu.memory_space<vmem>>, vector<1x8x64xbf16>
    %1 = vector.shape_cast %0 : vector<1x8x64xbf16> to vector<8x64xbf16>
    %c0_2 = arith.constant 0 : index
    %c0_3 = arith.constant 0 : index
    %c0_4 = arith.constant 0 : index
    %2 = vector.load %arg3[%c0_2, %c0_3, %c0_4] : memref<1x8x64xbf16, #tpu.memory_space<vmem>>, vector<1x8x64xbf16>
    %3 = vector.shape_cast %2 : vector<1x8x64xbf16> to vector<8x64xbf16>
    %c0_5 = arith.constant 0 : index
    %c0_6 = arith.constant 0 : index
    %c0_7 = arith.constant 0 : index
    %4 = vector.load %arg4[%c0_5, %c0_6, %c0_7] : memref<1x8x64xbf16, #tpu.memory_space<vmem>>, vector<1x8x64xbf16>
    %5 = vector.shape_cast %4 : vector<1x8x64xbf16> to vector<8x64xbf16>
    %c0_8 = arith.constant 0 : index
    %c0_9 = arith.constant 0 : index
    %6 = vector.load %arg5[%c0_8, %c0_9] : memref<8x8xf32, #tpu.memory_space<vmem>>, vector<8x8xf32>
    %cst = arith.constant 0.000000e+00 : f32
    %7 = vector.broadcast %cst : f32 to vector<8x32xf32>
    %8 = vector.extract_strided_slice %1 {offsets = [0, 0], sizes = [8, 16], strides = [1, 1]} : vector<8x64xbf16> to vector<8x16xbf16>
    %9 = vector.extract_strided_slice %3 {offsets = [0, 0], sizes = [8, 16], strides = [1, 1]} : vector<8x64xbf16> to vector<8x16xbf16>
    %10 = vector.extract_strided_slice %5 {offsets = [0, 0], sizes = [8, 16], strides = [1, 1]} : vector<8x64xbf16> to vector<8x16xbf16>
    %cst_10 = arith.constant dense<0.000000e+00> : vector<8x8xf32>
    %11 = tpu.matmul %8, %9, %cst_10 {dimension_numbers = #tpu.dot_dimension_numbers<[1], [1], [0], [0], [0, 0, 1, 0], [], []>} : vector<8x16xbf16>, vector<8x16xbf16>, vector<8x8xf32> -> vector<8x8xf32>
    %12 = arith.mulf %11, %11 : vector<8x8xf32>
    %cst_11 = arith.constant dense<0.000000e+00> : vector<8xf32>
    %13 = vector.multi_reduction <add>, %12, %cst_11 [1] : vector<8x8xf32> to vector<8xf32>
    %14 = vector.shape_cast %13 : vector<8xf32> to vector<8x1xf32>
    %15 = math.sqrt %14 : vector<8x1xf32>
    %16 = arith.mulf %11, %6 : vector<8x8xf32>
    %17 = arith.mulf %16, %16 : vector<8x8xf32>
    %cst_12 = arith.constant dense<0.000000e+00> : vector<8xf32>
    %18 = vector.multi_reduction <add>, %17, %cst_12 [1] : vector<8x8xf32> to vector<8xf32>
    %19 = vector.shape_cast %18 : vector<8xf32> to vector<8x1xf32>
    %cst_13 = arith.constant 1.000000e-24 : f32
    %20 = vector.broadcast %cst_13 : f32 to vector<8x1xf32>
    %21 = arith.maximumf %19, %20 : vector<8x1xf32>
    %22 = math.rsqrt %21 : vector<8x1xf32>
    %23 = arith.mulf %22, %15 : vector<8x1xf32>
    %24 = vector.broadcast %23 : vector<8x1xf32> to vector<8x8xf32>
    %25 = arith.mulf %16, %24 : vector<8x8xf32>
    %26 = arith.addf %11, %25 : vector<8x8xf32>
    %cst_14 = arith.constant dense<0xFF800000> : vector<8xf32>
    %27 = vector.multi_reduction <maximumf>, %26, %cst_14 [1] : vector<8x8xf32> to vector<8xf32>
    %28 = vector.shape_cast %27 : vector<8xf32> to vector<8x1xf32>
    %29 = vector.broadcast %28 : vector<8x1xf32> to vector<8x8xf32>
    %30 = arith.subf %26, %29 : vector<8x8xf32>
    %31 = math.exp %30 : vector<8x8xf32>
    %cst_15 = arith.constant dense<0.000000e+00> : vector<8xf32>
    %32 = vector.multi_reduction <add>, %31, %cst_15 [1] : vector<8x8xf32> to vector<8xf32>
    %33 = vector.shape_cast %32 : vector<8xf32> to vector<8x1xf32>
    %34 = tpu.reciprocal %33 {approx = true} : vector<8x1xf32> -> vector<8x1xf32>
    %35 = vector.broadcast %34 : vector<8x1xf32> to vector<8x8xf32>
    %36 = arith.mulf %31, %35 : vector<8x8xf32>
    %37 = arith.truncf %36 : vector<8x8xf32> to vector<8x8xbf16>
    %cst_16 = arith.constant dense<0.000000e+00> : vector<8x16xf32>
    %38 = tpu.matmul %37, %10, %cst_16 {dimension_numbers = #tpu.dot_dimension_numbers<[1], [0], [0], [1], [0, 0, 1, 1], [], []>} : vector<8x8xbf16>, vector<8x16xbf16>, vector<8x16xf32> -> vector<8x16xf32>
    %39 = arith.truncf %38 : vector<8x16xf32> to vector<8x16xbf16>
    %c0_17 = arith.constant 0 : index
    %c0_18 = arith.constant 0 : index
    %40 = vector.load %arg6[%c0_17, %c0_18] : memref<64x32xbf16, #tpu.memory_space<vmem>>, vector<16x32xbf16>
    %cst_19 = arith.constant dense<0.000000e+00> : vector<8x32xf32>
    %41 = tpu.matmul %39, %40, %cst_19 {dimension_numbers = #tpu.dot_dimension_numbers<[1], [0], [0], [1], [0, 0, 1, 1], [], []>} : vector<8x16xbf16>, vector<16x32xbf16>, vector<8x32xf32> -> vector<8x32xf32>
    %42 = arith.addf %7, %41 : vector<8x32xf32>
    %43 = vector.extract_strided_slice %1 {offsets = [0, 16], sizes = [8, 16], strides = [1, 1]} : vector<8x64xbf16> to vector<8x16xbf16>
    %44 = vector.extract_strided_slice %3 {offsets = [0, 16], sizes = [8, 16], strides = [1, 1]} : vector<8x64xbf16> to vector<8x16xbf16>
    %45 = vector.extract_strided_slice %5 {offsets = [0, 16], sizes = [8, 16], strides = [1, 1]} : vector<8x64xbf16> to vector<8x16xbf16>
    %cst_20 = arith.constant dense<0.000000e+00> : vector<8x8xf32>
    %46 = tpu.matmul %43, %44, %cst_20 {dimension_numbers = #tpu.dot_dimension_numbers<[1], [1], [0], [0], [0, 0, 1, 0], [], []>} : vector<8x16xbf16>, vector<8x16xbf16>, vector<8x8xf32> -> vector<8x8xf32>
    %47 = arith.mulf %46, %46 : vector<8x8xf32>
    %cst_21 = arith.constant dense<0.000000e+00> : vector<8xf32>
    %48 = vector.multi_reduction <add>, %47, %cst_21 [1] : vector<8x8xf32> to vector<8xf32>
    %49 = vector.shape_cast %48 : vector<8xf32> to vector<8x1xf32>
    %50 = math.sqrt %49 : vector<8x1xf32>
    %51 = arith.mulf %46, %6 : vector<8x8xf32>
    %52 = arith.mulf %51, %51 : vector<8x8xf32>
    %cst_22 = arith.constant dense<0.000000e+00> : vector<8xf32>
    %53 = vector.multi_reduction <add>, %52, %cst_22 [1] : vector<8x8xf32> to vector<8xf32>
    %54 = vector.shape_cast %53 : vector<8xf32> to vector<8x1xf32>
    %cst_23 = arith.constant 1.000000e-24 : f32
    %55 = vector.broadcast %cst_23 : f32 to vector<8x1xf32>
    %56 = arith.maximumf %54, %55 : vector<8x1xf32>
    %57 = math.rsqrt %56 : vector<8x1xf32>
    %58 = arith.mulf %57, %50 : vector<8x1xf32>
    %59 = vector.broadcast %58 : vector<8x1xf32> to vector<8x8xf32>
    %60 = arith.mulf %51, %59 : vector<8x8xf32>
    %61 = arith.addf %46, %60 : vector<8x8xf32>
    %cst_24 = arith.constant dense<0xFF800000> : vector<8xf32>
    %62 = vector.multi_reduction <maximumf>, %61, %cst_24 [1] : vector<8x8xf32> to vector<8xf32>
    %63 = vector.shape_cast %62 : vector<8xf32> to vector<8x1xf32>
    %64 = vector.broadcast %63 : vector<8x1xf32> to vector<8x8xf32>
    %65 = arith.subf %61, %64 : vector<8x8xf32>
    %66 = math.exp %65 : vector<8x8xf32>
    %cst_25 = arith.constant dense<0.000000e+00> : vector<8xf32>
    %67 = vector.multi_reduction <add>, %66, %cst_25 [1] : vector<8x8xf32> to vector<8xf32>
    %68 = vector.shape_cast %67 : vector<8xf32> to vector<8x1xf32>
    %69 = tpu.reciprocal %68 {approx = true} : vector<8x1xf32> -> vector<8x1xf32>
    %70 = vector.broadcast %69 : vector<8x1xf32> to vector<8x8xf32>
    %71 = arith.mulf %66, %70 : vector<8x8xf32>
    %72 = arith.truncf %71 : vector<8x8xf32> to vector<8x8xbf16>
    %cst_26 = arith.constant dense<0.000000e+00> : vector<8x16xf32>
    %73 = tpu.matmul %72, %45, %cst_26 {dimension_numbers = #tpu.dot_dimension_numbers<[1], [0], [0], [1], [0, 0, 1, 1], [], []>} : vector<8x8xbf16>, vector<8x16xbf16>, vector<8x16xf32> -> vector<8x16xf32>
    %74 = arith.truncf %73 : vector<8x16xf32> to vector<8x16xbf16>
    %c16 = arith.constant 16 : index
    %c0_27 = arith.constant 0 : index
    %75 = vector.load %arg6[%c16, %c0_27] : memref<64x32xbf16, #tpu.memory_space<vmem>>, vector<16x32xbf16>
    %cst_28 = arith.constant dense<0.000000e+00> : vector<8x32xf32>
    %76 = tpu.matmul %74, %75, %cst_28 {dimension_numbers = #tpu.dot_dimension_numbers<[1], [0], [0], [1], [0, 0, 1, 1], [], []>} : vector<8x16xbf16>, vector<16x32xbf16>, vector<8x32xf32> -> vector<8x32xf32>
    %77 = arith.addf %42, %76 : vector<8x32xf32>
    %78 = vector.extract_strided_slice %1 {offsets = [0, 32], sizes = [8, 16], strides = [1, 1]} : vector<8x64xbf16> to vector<8x16xbf16>
    %79 = vector.extract_strided_slice %3 {offsets = [0, 32], sizes = [8, 16], strides = [1, 1]} : vector<8x64xbf16> to vector<8x16xbf16>
    %80 = vector.extract_strided_slice %5 {offsets = [0, 32], sizes = [8, 16], strides = [1, 1]} : vector<8x64xbf16> to vector<8x16xbf16>
    %cst_29 = arith.constant dense<0.000000e+00> : vector<8x8xf32>
    %81 = tpu.matmul %78, %79, %cst_29 {dimension_numbers = #tpu.dot_dimension_numbers<[1], [1], [0], [0], [0, 0, 1, 0], [], []>} : vector<8x16xbf16>, vector<8x16xbf16>, vector<8x8xf32> -> vector<8x8xf32>
    %82 = arith.mulf %81, %81 : vector<8x8xf32>
    %cst_30 = arith.constant dense<0.000000e+00> : vector<8xf32>
    %83 = vector.multi_reduction <add>, %82, %cst_30 [1] : vector<8x8xf32> to vector<8xf32>
    %84 = vector.shape_cast %83 : vector<8xf32> to vector<8x1xf32>
    %85 = math.sqrt %84 : vector<8x1xf32>
    %86 = arith.mulf %81, %6 : vector<8x8xf32>
    %87 = arith.mulf %86, %86 : vector<8x8xf32>
    %cst_31 = arith.constant dense<0.000000e+00> : vector<8xf32>
    %88 = vector.multi_reduction <add>, %87, %cst_31 [1] : vector<8x8xf32> to vector<8xf32>
    %89 = vector.shape_cast %88 : vector<8xf32> to vector<8x1xf32>
    %cst_32 = arith.constant 1.000000e-24 : f32
    %90 = vector.broadcast %cst_32 : f32 to vector<8x1xf32>
    %91 = arith.maximumf %89, %90 : vector<8x1xf32>
    %92 = math.rsqrt %91 : vector<8x1xf32>
    %93 = arith.mulf %92, %85 : vector<8x1xf32>
    %94 = vector.broadcast %93 : vector<8x1xf32> to vector<8x8xf32>
    %95 = arith.mulf %86, %94 : vector<8x8xf32>
    %96 = arith.addf %81, %95 : vector<8x8xf32>
    %cst_33 = arith.constant dense<0xFF800000> : vector<8xf32>
    %97 = vector.multi_reduction <maximumf>, %96, %cst_33 [1] : vector<8x8xf32> to vector<8xf32>
    %98 = vector.shape_cast %97 : vector<8xf32> to vector<8x1xf32>
    %99 = vector.broadcast %98 : vector<8x1xf32> to vector<8x8xf32>
    %100 = arith.subf %96, %99 : vector<8x8xf32>
    %101 = math.exp %100 : vector<8x8xf32>
    %cst_34 = arith.constant dense<0.000000e+00> : vector<8xf32>
    %102 = vector.multi_reduction <add>, %101, %cst_34 [1] : vector<8x8xf32> to vector<8xf32>
    %103 = vector.shape_cast %102 : vector<8xf32> to vector<8x1xf32>
    %104 = tpu.reciprocal %103 {approx = true} : vector<8x1xf32> -> vector<8x1xf32>
    %105 = vector.broadcast %104 : vector<8x1xf32> to vector<8x8xf32>
    %106 = arith.mulf %101, %105 : vector<8x8xf32>
    %107 = arith.truncf %106 : vector<8x8xf32> to vector<8x8xbf16>
    %cst_35 = arith.constant dense<0.000000e+00> : vector<8x16xf32>
    %108 = tpu.matmul %107, %80, %cst_35 {dimension_numbers = #tpu.dot_dimension_numbers<[1], [0], [0], [1], [0, 0, 1, 1], [], []>} : vector<8x8xbf16>, vector<8x16xbf16>, vector<8x16xf32> -> vector<8x16xf32>
    %109 = arith.truncf %108 : vector<8x16xf32> to vector<8x16xbf16>
    %c32 = arith.constant 32 : index
    %c0_36 = arith.constant 0 : index
    %110 = vector.load %arg6[%c32, %c0_36] : memref<64x32xbf16, #tpu.memory_space<vmem>>, vector<16x32xbf16>
    %cst_37 = arith.constant dense<0.000000e+00> : vector<8x32xf32>
    %111 = tpu.matmul %109, %110, %cst_37 {dimension_numbers = #tpu.dot_dimension_numbers<[1], [0], [0], [1], [0, 0, 1, 1], [], []>} : vector<8x16xbf16>, vector<16x32xbf16>, vector<8x32xf32> -> vector<8x32xf32>
    %112 = arith.addf %77, %111 : vector<8x32xf32>
    %113 = vector.extract_strided_slice %1 {offsets = [0, 48], sizes = [8, 16], strides = [1, 1]} : vector<8x64xbf16> to vector<8x16xbf16>
    %114 = vector.extract_strided_slice %3 {offsets = [0, 48], sizes = [8, 16], strides = [1, 1]} : vector<8x64xbf16> to vector<8x16xbf16>
    %115 = vector.extract_strided_slice %5 {offsets = [0, 48], sizes = [8, 16], strides = [1, 1]} : vector<8x64xbf16> to vector<8x16xbf16>
    %cst_38 = arith.constant dense<0.000000e+00> : vector<8x8xf32>
    %116 = tpu.matmul %113, %114, %cst_38 {dimension_numbers = #tpu.dot_dimension_numbers<[1], [1], [0], [0], [0, 0, 1, 0], [], []>} : vector<8x16xbf16>, vector<8x16xbf16>, vector<8x8xf32> -> vector<8x8xf32>
    %117 = arith.mulf %116, %116 : vector<8x8xf32>
    %cst_39 = arith.constant dense<0.000000e+00> : vector<8xf32>
    %118 = vector.multi_reduction <add>, %117, %cst_39 [1] : vector<8x8xf32> to vector<8xf32>
    %119 = vector.shape_cast %118 : vector<8xf32> to vector<8x1xf32>
    %120 = math.sqrt %119 : vector<8x1xf32>
    %121 = arith.mulf %116, %6 : vector<8x8xf32>
    %122 = arith.mulf %121, %121 : vector<8x8xf32>
    %cst_40 = arith.constant dense<0.000000e+00> : vector<8xf32>
    %123 = vector.multi_reduction <add>, %122, %cst_40 [1] : vector<8x8xf32> to vector<8xf32>
    %124 = vector.shape_cast %123 : vector<8xf32> to vector<8x1xf32>
    %cst_41 = arith.constant 1.000000e-24 : f32
    %125 = vector.broadcast %cst_41 : f32 to vector<8x1xf32>
    %126 = arith.maximumf %124, %125 : vector<8x1xf32>
    %127 = math.rsqrt %126 : vector<8x1xf32>
    %128 = arith.mulf %127, %120 : vector<8x1xf32>
    %129 = vector.broadcast %128 : vector<8x1xf32> to vector<8x8xf32>
    %130 = arith.mulf %121, %129 : vector<8x8xf32>
    %131 = arith.addf %116, %130 : vector<8x8xf32>
    %cst_42 = arith.constant dense<0xFF800000> : vector<8xf32>
    %132 = vector.multi_reduction <maximumf>, %131, %cst_42 [1] : vector<8x8xf32> to vector<8xf32>
    %133 = vector.shape_cast %132 : vector<8xf32> to vector<8x1xf32>
    %134 = vector.broadcast %133 : vector<8x1xf32> to vector<8x8xf32>
    %135 = arith.subf %131, %134 : vector<8x8xf32>
    %136 = math.exp %135 : vector<8x8xf32>
    %cst_43 = arith.constant dense<0.000000e+00> : vector<8xf32>
    %137 = vector.multi_reduction <add>, %136, %cst_43 [1] : vector<8x8xf32> to vector<8xf32>
    %138 = vector.shape_cast %137 : vector<8xf32> to vector<8x1xf32>
    %139 = tpu.reciprocal %138 {approx = true} : vector<8x1xf32> -> vector<8x1xf32>
    %140 = vector.broadcast %139 : vector<8x1xf32> to vector<8x8xf32>
    %141 = arith.mulf %136, %140 : vector<8x8xf32>
    %142 = arith.truncf %141 : vector<8x8xf32> to vector<8x8xbf16>
    %cst_44 = arith.constant dense<0.000000e+00> : vector<8x16xf32>
    %143 = tpu.matmul %142, %115, %cst_44 {dimension_numbers = #tpu.dot_dimension_numbers<[1], [0], [0], [1], [0, 0, 1, 1], [], []>} : vector<8x8xbf16>, vector<8x16xbf16>, vector<8x16xf32> -> vector<8x16xf32>
    %144 = arith.truncf %143 : vector<8x16xf32> to vector<8x16xbf16>
    %c48 = arith.constant 48 : index
    %c0_45 = arith.constant 0 : index
    %145 = vector.load %arg6[%c48, %c0_45] : memref<64x32xbf16, #tpu.memory_space<vmem>>, vector<16x32xbf16>
    %cst_46 = arith.constant dense<0.000000e+00> : vector<8x32xf32>
    %146 = tpu.matmul %144, %145, %cst_46 {dimension_numbers = #tpu.dot_dimension_numbers<[1], [0], [0], [1], [0, 0, 1, 1], [], []>} : vector<8x16xbf16>, vector<16x32xbf16>, vector<8x32xf32> -> vector<8x32xf32>
    %147 = arith.addf %112, %146 : vector<8x32xf32>
    %c0_47 = arith.constant 0 : index
    %c0_48 = arith.constant 0 : index
    %148 = vector.load %arg7[%c0_47, %c0_48] : memref<1x32xf32, #tpu.memory_space<vmem>>, vector<1x32xf32>
    %149 = vector.broadcast %148 : vector<1x32xf32> to vector<8x32xf32>
    %150 = arith.addf %147, %149 : vector<8x32xf32>
    %c0_49 = arith.constant 0 : index
    %c0_50 = arith.constant 0 : index
    %c0_51 = arith.constant 0 : index
    %151 = vector.load %arg8[%c0_49, %c0_50, %c0_51] : memref<1x8x32xf32, #tpu.memory_space<vmem>>, vector<1x8x32xf32>
    %152 = vector.shape_cast %151 : vector<1x8x32xf32> to vector<8x32xf32>
    %153 = vector.shape_cast %150 : vector<8x32xf32> to vector<1x8x32xf32>
    tpu.vector_store %arg8[%c0_49, %c0_50, %c0_51], %153 {strides = array<i32>} : memref<1x8x32xf32, #tpu.memory_space<vmem>>, vector<1x8x32xf32>,
    return
  }
  func.func @transform_0(%arg0: i32, %arg1: i32) -> (i32, i32, i32) {
    %c0_i32 = arith.constant 0 : i32
    %c0_i32_0 = arith.constant 0 : i32
    return %arg0, %arg1, %c0_i32 : i32, i32, i32
  }
  func.func @transform_1(%arg0: i32, %arg1: i32) -> (i32, i32, i32) {
    %c0_i32 = arith.constant 0 : i32
    %c0_i32_0 = arith.constant 0 : i32
    %c0_i32_1 = arith.constant 0 : i32
    return %arg0, %c0_i32, %c0_i32_0 : i32, i32, i32
  }
  func.func @transform_2(%arg0: i32, %arg1: i32) -> (i32, i32, i32) {
    %c0_i32 = arith.constant 0 : i32
    %c0_i32_0 = arith.constant 0 : i32
    %c0_i32_1 = arith.constant 0 : i32
    return %arg0, %c0_i32, %c0_i32_0 : i32, i32, i32
  }
  func.func @transform_3(%arg0: i32, %arg1: i32) -> (i32, i32) {
    %c0_i32 = arith.constant 0 : i32
    %c0_i32_0 = arith.constant 0 : i32
    return %arg1, %c0_i32 : i32, i32
  }
  func.func @transform_4(%arg0: i32, %arg1: i32) -> (i32, i32) {
    %c0_i32 = arith.constant 0 : i32
    %c0_i32_0 = arith.constant 0 : i32
    %c0_i32_1 = arith.constant 0 : i32
    return %c0_i32, %c0_i32_0 : i32, i32
  }
  func.func @transform_5(%arg0: i32, %arg1: i32) -> (i32, i32) {
    %c0_i32 = arith.constant 0 : i32
    %c0_i32_0 = arith.constant 0 : i32
    %c0_i32_1 = arith.constant 0 : i32
    return %c0_i32, %c0_i32_0 : i32, i32
  }
  func.func @transform_6(%arg0: i32, %arg1: i32) -> (i32, i32, i32) {
    %c0_i32 = arith.constant 0 : i32
    %c0_i32_0 = arith.constant 0 : i32
    return %arg0, %arg1, %c0_i32 : i32, i32, i32
  }
}

</mosaic_0001>

<llo_original>
// kernel: mul.9
$region0: #{mul.9}
  %s0 = inlined_call_operand.vmem [shape: f32[4,16], index: 0, kind: input, shape index: {}]
  %s1 = inlined_call_operand.vmem [shape: f32[64], index: 1, kind: output, shape index: {}]
  $region1: #{mul.9} parent=0
    #allocation0 [shape = 'u8[4096]{0}', space=vmem, size = 0x1000, scoped, tag = 'scoped mem for output reshape']
    #allocation1 [shape = 'u8[4096]{0}', space=vmem, size = 0x1000, scoped, tag = 'scoped mem for input reshape']
    %s3 = sshllo.u32 0, 4
    %v4 = vld [vmem:[%s0] sm:%s3]
    %5 = vst [vmem:[#allocation1] sm:%s3] %v4
    %v6 = vld [vmem:[#allocation1] sm:$0x1]
    %vm7 = vcmask 130048
    %8 = vst.msk [vmem:[#allocation0] sm:$0x1] %vm7, %v6
    %s9 = scalar_lea.vmem [#allocation1], 3
    %v10 = vld [vmem:[%s9] sm:$0x1]
    %11 = vrot.lane.b32.xlu0 %v10, 48
    %v12 = vpop.permute.xlu0 %11
    %vm13 = vcmask 523648
    %14 = vst.msk [vmem:[#allocation0] sm:$0x1] %vm13, %v12
    %s15 = scalar_lea.vmem [#allocation1], 2
    %v16 = vld [vmem:[%s15] sm:$0x1]
    %17 = vrot.lane.b32.xlu0 %v16, 32
    %v18 = vpop.permute.xlu0 %17
    %vm19 = vcmask 392448
    %20 = vst.msk [vmem:[#allocation0] sm:$0x1] %vm19, %v18
    %s21 = scalar_lea.vmem [#allocation1], 1
    %v22 = vld [vmem:[%s21] sm:$0x1]
    %23 = vrot.lane.b32.xlu0 %v22, 16
    %v24 = vpop.permute.xlu0 %23
    %vm25 = vcmask 261248
    %26 = vst.msk [vmem:[#allocation0] sm:$0x1] %vm25, %v24
    %s28 = sshllo.u32 0, 1
    %v30 = vld [vmem:[#allocation0] sm:%s28]
    %s31 = sshllo.u32 0, 1
    %32 = vst [vmem:[%s1] sm:%s31] %v30

// kernel: attention_spd_forward.2
$region0: #{attention_spd_forward.2}
  #allocation0 [shape = 'u32[]', space=smem, size = 0x4, offset = 0x4, fixed_abs, tag = 'smem constant byte address 0x4 - core index']
  #allocation1 [shape = 'u32[144,128]{1,0:T(1,128)}', space=vmem, size = 0x12000, scoped, tag = 'internal scratch']
  #allocation2 [shape = 'f32[16,64]{1,0:T(8,128)}', space=vmem, size = 0x2000, scoped, tag = 'scratch operand']
  #allocation3 [shape = 'f32[16,64]{1,0:T(8,128)}', space=vmem, size = 0x2000, scoped, tag = 'scratch operand']
  #allocation4 [shape = 'f32[16,64]{1,0:T(8,128)}', space=vmem, size = 0x2000, scoped, tag = 'scratch operand']
  %s0 = inlined_call_operand.vmem [shape: f32[16,32], index: 0, kind: input, shape index: {}]
  %s1 = inlined_call_operand.vmem [shape: bf16[32,64], index: 1, kind: input, shape index: {}]
  %s2 = inlined_call_operand.vmem [shape: bf16[32,64], index: 2, kind: input, shape index: {}]
  %s3 = inlined_call_operand.vmem [shape: bf16[32,64], index: 3, kind: input, shape index: {}]
  %s4 = inlined_call_operand.vmem [shape: bf16[16,64], index: 4, kind: output, shape index: {0}]
  %s5 = inlined_call_operand.vmem [shape: bf16[16,64], index: 5, kind: output, shape index: {1}]
  %s6 = inlined_call_operand.vmem [shape: bf16[16,64], index: 6, kind: output, shape index: {2}]
  %7 = xla_tuple %s4, %s5, %s6
  %s8 = sld [smem:[#allocation0]]
  $region50: #{attention_spd_forward.2} parent=0
    _
  %s10 = ssub.s32 1, %s8
  %s11 = scalar_select 0, %s10, %s8
  // Predicated region
  $region2: #{attention_spd_forward.2} parent=0 // pred_check
    _
  $region3: #{attention_spd_forward.2} parent=0 // pred_check_branch
    %13 = sbr.rel (0) target = $region5
  $region4: #{attention_spd_forward.2} parent=0 // pred_region
    _
  $region5: #{attention_spd_forward.2} parent=0 // pred_fallthru
    _
  // Predicated region
  $region6: #{attention_spd_forward.2} parent=0 // pred_check
    _
  $region7: #{attention_spd_forward.2} parent=0 // pred_check_branch
    %15 = sbr.rel (0) target = $region9
  $region8: #{attention_spd_forward.2} parent=0 // pred_region
    _
  $region9: #{attention_spd_forward.2} parent=0 // pred_fallthru
    _
  // Predicated region
  $region10: #{attention_spd_forward.2} parent=0 // pred_check
    _
  $region11: #{attention_spd_forward.2} parent=0 // pred_check_branch
    %17 = sbr.rel (0) target = $region13
  $region12: #{attention_spd_forward.2} parent=0 // pred_region
    _
  $region13: #{attention_spd_forward.2} parent=0 // pred_fallthru
    _
  // Predicated region
  $region14: #{attention_spd_forward.2} parent=0 // pred_check
    _
  $region15: #{attention_spd_forward.2} parent=0 // pred_check_branch
    %19 = sbr.rel (0) target = $region17
  $region16: #{attention_spd_forward.2} parent=0 // pred_region
    _
  $region17: #{attention_spd_forward.2} parent=0 // pred_fallthru
    _
  %p21 = scmp.eq.s32.totalorder 0, 0
  // Predicated region
  $region18: #{attention_spd_forward.2} parent=0 // pred_check
    %p22 = pneg %p21
  $region19: #{attention_spd_forward.2} parent=0 // pred_check_branch
    %24 = sbr.rel (%p22) target = $region21
  $region20: #{attention_spd_forward.2} parent=0 // pred_region
    %vm25 = vcmask 523264
    %26 = vst.msk [vmem:[#allocation2] sm:$0xff] %vm25, 0.0
    %27 = vst.msk [vmem:[#allocation2 + $0x8] sm:$0xff] %vm25, 0.0
    %28 = vst.msk [vmem:[#allocation3] sm:$0xff] %vm25, 0.0
    %29 = vst.msk [vmem:[#allocation3 + $0x8] sm:$0xff] %vm25, 0.0
    %30 = vst.msk [vmem:[#allocation4] sm:$0xff] %vm25, 0.0
    %31 = vst.msk [vmem:[#allocation4 + $0x8] sm:$0xff] %vm25, 0.0
  $region21: #{attention_spd_forward.2} parent=0 // pred_fallthru
    _
  %v32 = vld [vmem:[%s0] sm:$0xff]
  %v33 = vld [vmem:[%s0 + $0x8] sm:$0xff]
  %v34 = vpack.c.bf16 %v33, %v32
  %v35 = vld [vmem:[#allocation2] sm:$0xff]
  %v36 = vld [vmem:[#allocation2 + $0x8] sm:$0xff]
  %v37 = vld [vmem:[%s1] sm:$0xf]
  %v38 = vld [vmem:[%s1 + $0x4] sm:$0xf]
  %v39 = vld [vmem:[%s1 + $0x8] sm:$0xf]
  %v40 = vld [vmem:[%s1 + $0xc] sm:$0xf]
  %v45 = vunpack.c.l.b16 %v37
  %v46 = vunpack.c.l.b16 %v38
  %v47 = vunpack.c.l.b16 %v39
  %v48 = vunpack.c.l.b16 %v40
  %v49 = vpack.c.b16 %v46, %v45
  %v50 = vpack.c.b16 %v48, %v47
  %vm53 = vcmask 261120
  %v55 = vsel %vm53, %v34, 0
  %57 = vmatprep.subr.bf16.mxu0 0
  %58 = vmatpush1.bf16.msra.mxu0 %v49
  %59 = vmatprep.subr.bf16.mxu0 0
  %60 = vmatpush1.bf16.msra.mxu0 %v50
  %61 = vmatprep.subr.bf16.mxu0 0
  %62 = vmatpush1.bf16.msra.mxu0 0
  %63 = vmatprep.subr.bf16.mxu0 0
  %64 = vmatpush1.bf16.msra.mxu0 0
  %65 = vmatprep.subr.bf16.mxu0 0
  %66 = vmatpush1.bf16.msra.mxu0 0
  %67 = vmatprep.subr.bf16.mxu0 0
  %68 = vmatpush1.bf16.msra.mxu0 0
  %69 = vmatprep.subr.bf16.mxu0 0
  %70 = vmatpush1.bf16.msra.mxu0 0
  %71 = vmatprep.subr.bf16.mxu0 0
  %72 = vmatpush1.bf16.msra.mxu0 0
  %73 = vmatprep.subr.bf16.mxu0 0
  %74 = vmatpush1.bf16.msra.mxu0 0
  %75 = vmatprep.subr.bf16.mxu0 0
  %76 = vmatpush1.bf16.msra.mxu0 0
  %77 = vmatprep.subr.bf16.mxu0 0
  %78 = vmatpush1.bf16.msra.mxu0 0
  %79 = vmatprep.subr.bf16.mxu0 0
  %80 = vmatpush1.bf16.msra.mxu0 0
  %81 = vmatprep.subr.bf16.mxu0 0
  %82 = vmatpush1.bf16.msra.mxu0 0
  %83 = vmatprep.subr.bf16.mxu0 0
  %84 = vmatpush1.bf16.msra.mxu0 0
  %85 = vmatprep.subr.bf16.mxu0 0
  %86 = vmatpush1.bf16.msra.mxu0 0
  %87 = vmatprep.subr.bf16.mxu0 0
  %88 = vmatpush1.bf16.msra.mxu0 0
  %89 = vmatprep.mubr.bf16.mxu0 0
  %90 = vmatmul.mubr.bf16.gmra.mrb[0].mxu0 %v55
  %v91 = vpop.f32.mrb[0].mxu0
  %v92 = vadd.f32 0.0, %v91
  %v93 = vpop.f32.mrb[0].mxu0
  %v94 = vpop.f32.mrb[0].mxu0
  %v95 = vadd.f32 0.0, %v94
  %v96 = vpop.f32.mrb[0].mxu0
  %97 = vdwg.mxu0
  %v98 = vadd.f32 %v35, %v92
  %v99 = vadd.f32 %v36, %v95
  %vm100 = vcmask 523264
  %101 = vst.msk [vmem:[#allocation2] sm:$0xff] %vm100, %v98
  %102 = vst.msk [vmem:[#allocation2 + $0x8] sm:$0xff] %vm100, %v99
  %v103 = vld [vmem:[#allocation3] sm:$0xff]
  %v104 = vld [vmem:[#allocation3 + $0x8] sm:$0xff]
  %v105 = vld [vmem:[%s2] sm:$0xf]
  %v106 = vld [vmem:[%s2 + $0x4] sm:$0xf]
  %v107 = vld [vmem:[%s2 + $0x8] sm:$0xf]
  %v108 = vld [vmem:[%s2 + $0xc] sm:$0xf]
  %v113 = vunpack.c.l.b16 %v105
  %v114 = vunpack.c.l.b16 %v106
  %v115 = vunpack.c.l.b16 %v107
  %v116 = vunpack.c.l.b16 %v108
  %v117 = vpack.c.b16 %v114, %v113
  %v118 = vpack.c.b16 %v116, %v115
  %121 = vmatprep.subr.bf16.mxu0 0
  %122 = vmatpush1.bf16.msra.mxu0 %v117
  %123 = vmatprep.subr.bf16.mxu0 0
  %124 = vmatpush1.bf16.msra.mxu0 %v118
  %125 = vmatprep.subr.bf16.mxu0 0
  %126 = vmatpush1.bf16.msra.mxu0 0
  %127 = vmatprep.subr.bf16.mxu0 0
  %128 = vmatpush1.bf16.msra.mxu0 0
  %129 = vmatprep.subr.bf16.mxu0 0
  %130 = vmatpush1.bf16.msra.mxu0 0
  %131 = vmatprep.subr.bf16.mxu0 0
  %132 = vmatpush1.bf16.msra.mxu0 0
  %133 = vmatprep.subr.bf16.mxu0 0
  %134 = vmatpush1.bf16.msra.mxu0 0
  %135 = vmatprep.subr.bf16.mxu0 0
  %136 = vmatpush1.bf16.msra.mxu0 0
  %137 = vmatprep.subr.bf16.mxu0 0
  %138 = vmatpush1.bf16.msra.mxu0 0
  %139 = vmatprep.subr.bf16.mxu0 0
  %140 = vmatpush1.bf16.msra.mxu0 0
  %141 = vmatprep.subr.bf16.mxu0 0
  %142 = vmatpush1.bf16.msra.mxu0 0
  %143 = vmatprep.subr.bf16.mxu0 0
  %144 = vmatpush1.bf16.msra.mxu0 0
  %145 = vmatprep.subr.bf16.mxu0 0
  %146 = vmatpush1.bf16.msra.mxu0 0
  %147 = vmatprep.subr.bf16.mxu0 0
  %148 = vmatpush1.bf16.msra.mxu0 0
  %149 = vmatprep.subr.bf16.mxu0 0
  %150 = vmatpush1.bf16.msra.mxu0 0
  %151 = vmatprep.subr.bf16.mxu0 0
  %152 = vmatpush1.bf16.msra.mxu0 0
  %153 = vmatprep.mubr.bf16.mxu0 0
  %154 = vmatmul.mubr.bf16.gmra.mrb[0].mxu0 %v55
  %v155 = vpop.f32.mrb[0].mxu0
  %v156 = vadd.f32 0.0, %v155
  %v157 = vpop.f32.mrb[0].mxu0
  %v158 = vpop.f32.mrb[0].mxu0
  %v159 = vadd.f32 0.0, %v158
  %v160 = vpop.f32.mrb[0].mxu0
  %161 = vdwg.mxu0
  %v162 = vadd.f32 %v103, %v156
  %v163 = vadd.f32 %v104, %v159
  %164 = vst.msk [vmem:[#allocation3] sm:$0xff] %vm100, %v162
  %165 = vst.msk [vmem:[#allocation3 + $0x8] sm:$0xff] %vm100, %v163
  %v166 = vld [vmem:[#allocation4] sm:$0xff]
  %v167 = vld [vmem:[#allocation4 + $0x8] sm:$0xff]
  %v168 = vld [vmem:[%s3] sm:$0xf]
  %v169 = vld [vmem:[%s3 + $0x4] sm:$0xf]
  %v170 = vld [vmem:[%s3 + $0x8] sm:$0xf]
  %v171 = vld [vmem:[%s3 + $0xc] sm:$0xf]
  %v176 = vunpack.c.l.b16 %v168
  %v177 = vunpack.c.l.b16 %v169
  %v178 = vunpack.c.l.b16 %v170
  %v179 = vunpack.c.l.b16 %v171
  %v180 = vpack.c.b16 %v177, %v176
  %v181 = vpack.c.b16 %v179, %v178
  %184 = vmatprep.subr.bf16.mxu0 0
  %185 = vmatpush1.bf16.msra.mxu0 %v180
  %186 = vmatprep.subr.bf16.mxu0 0
  %187 = vmatpush1.bf16.msra.mxu0 %v181
  %188 = vmatprep.subr.bf16.mxu0 0
  %189 = vmatpush1.bf16.msra.mxu0 0
  %190 = vmatprep.subr.bf16.mxu0 0
  %191 = vmatpush1.bf16.msra.mxu0 0
  %192 = vmatprep.subr.bf16.mxu0 0
  %193 = vmatpush1.bf16.msra.mxu0 0
  %194 = vmatprep.subr.bf16.mxu0 0
  %195 = vmatpush1.bf16.msra.mxu0 0
  %196 = vmatprep.subr.bf16.mxu0 0
  %197 = vmatpush1.bf16.msra.mxu0 0
  %198 = vmatprep.subr.bf16.mxu0 0
  %199 = vmatpush1.bf16.msra.mxu0 0
  %200 = vmatprep.subr.bf16.mxu0 0
  %201 = vmatpush1.bf16.msra.mxu0 0
  %202 = vmatprep.subr.bf16.mxu0 0
  %203 = vmatpush1.bf16.msra.mxu0 0
  %204 = vmatprep.subr.bf16.mxu0 0
  %205 = vmatpush1.bf16.msra.mxu0 0
  %206 = vmatprep.subr.bf16.mxu0 0
  %207 = vmatpush1.bf16.msra.mxu0 0
  %208 = vmatprep.subr.bf16.mxu0 0
  %209 = vmatpush1.bf16.msra.mxu0 0
  %210 = vmatprep.subr.bf16.mxu0 0
  %211 = vmatpush1.bf16.msra.mxu0 0
  %212 = vmatprep.subr.bf16.mxu0 0
  %213 = vmatpush1.bf16.msra.mxu0 0
  %214 = vmatprep.subr.bf16.mxu0 0
  %215 = vmatpush1.bf16.msra.mxu0 0
  %216 = vmatprep.mubr.bf16.mxu0 0
  %217 = vmatmul.mubr.bf16.gmra.mrb[0].mxu0 %v55
  %v218 = vpop.f32.mrb[0].mxu0
  %v219 = vadd.f32 0.0, %v218
  %v220 = vpop.f32.mrb[0].mxu0
  %v221 = vpop.f32.mrb[0].mxu0
  %v222 = vadd.f32 0.0, %v221
  %v223 = vpop.f32.mrb[0].mxu0
  %224 = vdwg.mxu0
  %v225 = vadd.f32 %v166, %v219
  %v226 = vadd.f32 %v167, %v222
  %227 = vst.msk [vmem:[#allocation4] sm:$0xff] %vm100, %v225
  %228 = vst.msk [vmem:[#allocation4 + $0x8] sm:$0xff] %vm100, %v226
  // Predicated region
  $region22: #{attention_spd_forward.2} parent=0 // pred_check
    %p229 = pneg %p21
  $region23: #{attention_spd_forward.2} parent=0 // pred_check_branch
    %231 = sbr.rel (%p229) target = $region25
  $region24: #{attention_spd_forward.2} parent=0 // pred_region
    %v232 = vld [vmem:[#allocation2] sm:$0xff]
    %v233 = vld [vmem:[#allocation2 + $0x8] sm:$0xff]
    %v234 = vpack.c.bf16 %v233, %v232
    %v236 = vunpack.c.l.b16 %v234
    %v237 = vunpack.c.h.b16 %v234
    %v238 = vpack.c.b16 %v236, %v236
    %v239 = vpack.c.b16 %v237, %v237
    %vm242 = vcmask 519168
    %243 = vst.msk [vmem:[%s4] sm:$0xf] %vm242, %v238
    %244 = vst.msk [vmem:[%s4 + $0x4] sm:$0xf] %vm242, %v239
    %v245 = vld [vmem:[#allocation3] sm:$0xff]
    %v246 = vld [vmem:[#allocation3 + $0x8] sm:$0xff]
    %v247 = vpack.c.bf16 %v246, %v245
    %v249 = vunpack.c.l.b16 %v247
    %v250 = vunpack.c.h.b16 %v247
    %v251 = vpack.c.b16 %v249, %v249
    %v252 = vpack.c.b16 %v250, %v250
    %255 = vst.msk [vmem:[%s5] sm:$0xf] %vm242, %v251
    %256 = vst.msk [vmem:[%s5 + $0x4] sm:$0xf] %vm242, %v252
    %v257 = vld [vmem:[#allocation4] sm:$0xff]
    %v258 = vld [vmem:[#allocation4 + $0x8] sm:$0xff]
    %v259 = vpack.c.bf16 %v258, %v257
    %v261 = vunpack.c.l.b16 %v259
    %v262 = vunpack.c.h.b16 %v259
    %v263 = vpack.c.b16 %v261, %v261
    %v264 = vpack.c.b16 %v262, %v262
    %267 = vst.msk [vmem:[%s6] sm:$0xf] %vm242, %v263
    %268 = vst.msk [vmem:[%s6 + $0x4] sm:$0xf] %vm242, %v264
  $region25: #{attention_spd_forward.2} parent=0 // pred_fallthru
    _
  // Predicated region
  $region26: #{attention_spd_forward.2} parent=0 // pred_check
    _
  $region27: #{attention_spd_forward.2} parent=0 // pred_check_branch
    %270 = sbr.rel (0) target = $region29
  $region28: #{attention_spd_forward.2} parent=0 // pred_region
    _
  $region29: #{attention_spd_forward.2} parent=0 // pred_fallthru
    _
  // Predicated region
  $region30: #{attention_spd_forward.2} parent=0 // pred_check
    _
  $region31: #{attention_spd_forward.2} parent=0 // pred_check_branch
    %272 = sbr.rel (0) target = $region33
  $region32: #{attention_spd_forward.2} parent=0 // pred_region
    _
  $region33: #{attention_spd_forward.2} parent=0 // pred_fallthru
    _
  // Predicated region
  $region34: #{attention_spd_forward.2} parent=0 // pred_check
    _
  $region35: #{attention_spd_forward.2} parent=0 // pred_check_branch
    %274 = sbr.rel (0) target = $region37
  $region36: #{attention_spd_forward.2} parent=0 // pred_region
    _
  $region37: #{attention_spd_forward.2} parent=0 // pred_fallthru
    _
  // Predicated region
  $region38: #{attention_spd_forward.2} parent=0 // pred_check
    _
  $region39: #{attention_spd_forward.2} parent=0 // pred_check_branch
    %276 = sbr.rel (0) target = $region41
  $region40: #{attention_spd_forward.2} parent=0 // pred_region
    _
  $region41: #{attention_spd_forward.2} parent=0 // pred_fallthru
    _
  // Predicated region
  $region42: #{attention_spd_forward.2} parent=0 // pred_check
    _
  $region43: #{attention_spd_forward.2} parent=0 // pred_check_branch
    %278 = sbr.rel (0) target = $region45
  $region44: #{attention_spd_forward.2} parent=0 // pred_region
    _
  $region45: #{attention_spd_forward.2} parent=0 // pred_fallthru
    _
  // Predicated region
  $region46: #{attention_spd_forward.2} parent=0 // pred_check
    _
  $region47: #{attention_spd_forward.2} parent=0 // pred_check_branch
    %280 = sbr.rel (0) target = $region49
  $region48: #{attention_spd_forward.2} parent=0 // pred_region
    _
  $region49: #{attention_spd_forward.2} parent=0 // pred_fallthru
    _

// kernel: attention_spd_forward.3
$region0: #{attention_spd_forward.3}
  #allocation0 [shape = 'u32[]', space=smem, size = 0x4, offset = 0x4, fixed_abs, tag = 'smem constant byte address 0x4 - core index']
  #allocation1 [shape = 'u32[144,128]{1,0:T(1,128)}', space=vmem, size = 0x12000, scoped, tag = 'internal scratch']
  %s0 = inlined_call_operand.vmem [shape: bf16[2,8,64], index: 0, kind: input, shape index: {}]
  %s1 = inlined_call_operand.vmem [shape: bf16[2,8,64], index: 1, kind: input, shape index: {}]
  %s2 = inlined_call_operand.vmem [shape: bf16[2,8,64], index: 2, kind: input, shape index: {}]
  %s3 = inlined_call_operand.vmem [shape: f32[8,8], index: 3, kind: input, shape index: {}]
  %s4 = inlined_call_operand.vmem [shape: bf16[64,32], index: 4, kind: input, shape index: {}]
  %s5 = inlined_call_operand.vmem [shape: f32[1,32], index: 5, kind: input, shape index: {}]
  %s6 = inlined_call_operand.hbm [shape: f32[2,8,32], index: 6, kind: output, shape index: {}]
  %s7 = sld [smem:[#allocation0]]
  $region57: #{attention_spd_forward.3} parent=0
    _
  %s9 = ssub.s32 1, %s7
  %s10 = scalar_select 0, %s9, %s7
  $region1: #{attention_spd_forward.3} parent=0
    #allocation2 [shape = 'u8[8192]{0}', space=vmem, size = 0x2000, scoped, tag = 'output window, operand 0']
    #allocation3 [shape = 's32[2]{0}', space=sflag, size = 0x8, scoped, tag = 'scoped memory for attention_spd_forward.3']
    %11 = vsyncpa [#allocation3], 0
    %s12 = scalar_lea.sflag [#allocation3], 1
    %13 = vsyncpa %s12, 0
    loop: start=0, step=1, limit=4
    $region2: #{attention_spd_forward.3} parent=1 // loop_pre_header
      _
    $region3: #{attention_spd_forward.3} parent=1 // loop_header
      %s15 = sphi 0, %s19
      %p16 = scmp.ge.s32.totalorder %s15, 4
      %s22 = sphi 0, %s34
      %s23 = sphi 0, %s30
      %s24 = sphi 0, %s22
      %s25 = sphi 0, %s23
      %s26 = sphi 0, %s24
      %s27 = sphi 0, %s25
      %s39 = sphi 0, %s41
      %s42 = sphi 0, %s39
      %s43 = sphi 0, %s42
      %s59 = sphi 0, %s43
      %s65 = sphi 0, %s67
      %s68 = sphi 0, %s65
      %s69 = sphi 0, %s68
      %s85 = sphi 0, %s69
      %s91 = sphi 0, %s93
      %s94 = sphi 0, %s91
      %s95 = sphi 0, %s94
      %s111 = sphi 0, %s95
      %s117 = sphi 0, %s119
      %s120 = sphi 0, %s117
      %s121 = sphi 0, %s120
      %s137 = sphi 0, %s121
      %s141 = sphi 0, %s141
      %s143 = sphi 0, %s141
      %s144 = sphi 0, %s143
      %s158 = sphi 0, %s144
      %s162 = sphi 0, %s162
      %s164 = sphi 0, %s162
      %s165 = sphi 0, %s164
      %s179 = sphi 0, %s165
      %s187 = sphi 0, %s189
      %s190 = sphi 0, %s187
      %s191 = sphi 0, %s190
      %s207 = sphi 0, %s191
    $region4: #{attention_spd_forward.3} parent=1 // loop_header_branch
      %18 = sbr.rel (%p16) target = $region8
    $region5: #{attention_spd_forward.3} parent=1 // loop_body
      %s20 = ssub.s32 %s15, 1
      %s21 = ssub.s32 %s15, 2
      %s28 = sadd.s32 1, %s23
      %p29 = scmp.ge.s32.totalorder %s28, 1
      %s30 = scalar_select %p29, 0, %s28
      %s31 = sadd.s32 1, %s22
      %s32 = scalar_select %p29, %s31, %s22
      %p33 = scmp.ge.s32.totalorder %s32, 2
      %s34 = scalar_select %p33, 0, %s32
      %s35 = ssub.s32 %s22, %s34
      %s36 = ssub.s32 %s23, %s30
      %s37 = sor.u32 %s35, %s36
      %p38 = scmp.eq.s32.totalorder %s37, 0
      %s40 = sadd.s32 %s39, 1
      %s41 = scalar_select %p38, %s39, %s40
      %p44 = pneg %p38
      %p45 = scmp.eq.s32.totalorder %s15, 1
      %p46 = por %p44, %p45
      %p47 = scmp.ne.s32.totalorder %s39, %s42
      %p48 = scmp.eq.s32.totalorder %s15, 0
      %p49 = por %p47, %p48
      %p50 = scmp.ne.s32.totalorder %s39, %s42
      %p51 = scmp.eq.s32.totalorder %s20, 1
      %p52 = por %p50, %p51
      %p53 = scmp.ne.s32.totalorder %s42, %s43
      %p54 = scmp.eq.s32.totalorder %s20, 0
      %p55 = por %p53, %p54
      %p56 = scmp.ne.s32.totalorder %s42, %s43
      %p57 = scmp.eq.s32.totalorder %s21, 1
      %p58 = por %p56, %p57
      %p60 = scmp.ne.s32.totalorder %s43, %s59
      %p61 = scmp.eq.s32.totalorder %s21, 0
      %p62 = por %p60, %p61
      %s63 = ssub.s32 %s22, %s34
      %p64 = scmp.eq.s32.totalorder %s63, 0
      %s66 = sadd.s32 %s65, 1
      %s67 = scalar_select %p64, %s65, %s66
      %p70 = pneg %p64
      %p71 = scmp.eq.s32.totalorder %s15, 1
      %p72 = por %p70, %p71
      %p73 = scmp.ne.s32.totalorder %s65, %s68
      %p74 = scmp.eq.s32.totalorder %s15, 0
      %p75 = por %p73, %p74
      %p76 = scmp.ne.s32.totalorder %s65, %s68
      %p77 = scmp.eq.s32.totalorder %s20, 1
      %p78 = por %p76, %p77
      %p79 = scmp.ne.s32.totalorder %s68, %s69
      %p80 = scmp.eq.s32.totalorder %s20, 0
      %p81 = por %p79, %p80
      %p82 = scmp.ne.s32.totalorder %s68, %s69
      %p83 = scmp.eq.s32.totalorder %s21, 1
      %p84 = por %p82, %p83
      %p86 = scmp.ne.s32.totalorder %s69, %s85
      %p87 = scmp.eq.s32.totalorder %s21, 0
      %p88 = por %p86, %p87
      %s89 = ssub.s32 %s22, %s34
      %p90 = scmp.eq.s32.totalorder %s89, 0
      %s92 = sadd.s32 %s91, 1
      %s93 = scalar_select %p90, %s91, %s92
      %p96 = pneg %p90
      %p97 = scmp.eq.s32.totalorder %s15, 1
      %p98 = por %p96, %p97
      %p99 = scmp.ne.s32.totalorder %s91, %s94
      %p100 = scmp.eq.s32.totalorder %s15, 0
      %p101 = por %p99, %p100
      %p102 = scmp.ne.s32.totalorder %s91, %s94
      %p103 = scmp.eq.s32.totalorder %s20, 1
      %p104 = por %p102, %p103
      %p105 = scmp.ne.s32.totalorder %s94, %s95
      %p106 = scmp.eq.s32.totalorder %s20, 0
      %p107 = por %p105, %p106
      %p108 = scmp.ne.s32.totalorder %s94, %s95
      %p109 = scmp.eq.s32.totalorder %s21, 1
      %p110 = por %p108, %p109
      %p112 = scmp.ne.s32.totalorder %s95, %s111
      %p113 = scmp.eq.s32.totalorder %s21, 0
      %p114 = por %p112, %p113
      %s115 = ssub.s32 %s23, %s30
      %p116 = scmp.eq.s32.totalorder %s115, 0
      %s118 = sadd.s32 %s117, 1
      %s119 = scalar_select %p116, %s117, %s118
      %p122 = pneg %p116
      %p123 = scmp.eq.s32.totalorder %s15, 1
      %p124 = por %p122, %p123
      %p125 = scmp.ne.s32.totalorder %s117, %s120
      %p126 = scmp.eq.s32.totalorder %s15, 0
      %p127 = por %p125, %p126
      %p128 = scmp.ne.s32.totalorder %s117, %s120
      %p129 = scmp.eq.s32.totalorder %s20, 1
      %p130 = por %p128, %p129
      %p131 = scmp.ne.s32.totalorder %s120, %s121
      %p132 = scmp.eq.s32.totalorder %s20, 0
      %p133 = por %p131, %p132
      %p134 = scmp.ne.s32.totalorder %s120, %s121
      %p135 = scmp.eq.s32.totalorder %s21, 1
      %p136 = por %p134, %p135
      %p138 = scmp.ne.s32.totalorder %s121, %s137
      %p139 = scmp.eq.s32.totalorder %s21, 0
      %p140 = por %p138, %p139
      %s142 = sadd.s32 %s141, 1
      %p145 = scmp.eq.s32.totalorder %s15, 1
      %p146 = scmp.ne.s32.totalorder %s141, %s143
      %p147 = scmp.eq.s32.totalorder %s15, 0
      %p148 = por %p146, %p147
      %p149 = scmp.ne.s32.totalorder %s141, %s143
      %p150 = scmp.eq.s32.totalorder %s20, 1
      %p151 = por %p149, %p150
      %p152 = scmp.ne.s32.totalorder %s143, %s144
      %p153 = scmp.eq.s32.totalorder %s20, 0
      %p154 = por %p152, %p153
      %p155 = scmp.ne.s32.totalorder %s143, %s144
      %p156 = scmp.eq.s32.totalorder %s21, 1
      %p157 = por %p155, %p156
      %p159 = scmp.ne.s32.totalorder %s144, %s158
      %p160 = scmp.eq.s32.totalorder %s21, 0
      %p161 = por %p159, %p160
      %s163 = sadd.s32 %s162, 1
      %p166 = scmp.eq.s32.totalorder %s15, 1
      %p167 = scmp.ne.s32.totalorder %s162, %s164
      %p168 = scmp.eq.s32.totalorder %s15, 0
      %p169 = por %p167, %p168
      %p170 = scmp.ne.s32.totalorder %s162, %s164
      %p171 = scmp.eq.s32.totalorder %s20, 1
      %p172 = por %p170, %p171
      %p173 = scmp.ne.s32.totalorder %s164, %s165
      %p174 = scmp.eq.s32.totalorder %s20, 0
      %p175 = por %p173, %p174
      %p176 = scmp.ne.s32.totalorder %s164, %s165
      %p177 = scmp.eq.s32.totalorder %s21, 1
      %p178 = por %p176, %p177
      %p180 = scmp.ne.s32.totalorder %s165, %s179
      %p181 = scmp.eq.s32.totalorder %s21, 0
      %p182 = por %p180, %p181
      %s183 = ssub.s32 %s22, %s34
      %s184 = ssub.s32 %s23, %s30
      %s185 = sor.u32 %s183, %s184
      %p186 = scmp.eq.s32.totalorder %s185, 0
      %s188 = sadd.s32 %s187, 1
      %s189 = scalar_select %p186, %s187, %s188
      %p192 = pneg %p186
      %p193 = scmp.eq.s32.totalorder %s15, 1
      %p194 = por %p192, %p193
      %p195 = scmp.ne.s32.totalorder %s187, %s190
      %p196 = scmp.eq.s32.totalorder %s15, 0
      %p197 = por %p195, %p196
      %p198 = scmp.ne.s32.totalorder %s187, %s190
      %p199 = scmp.eq.s32.totalorder %s20, 1
      %p200 = por %p198, %p199
      %p201 = scmp.ne.s32.totalorder %s190, %s191
      %p202 = scmp.eq.s32.totalorder %s20, 0
      %p203 = por %p201, %p202
      %p204 = scmp.ne.s32.totalorder %s190, %s191
      %p205 = scmp.eq.s32.totalorder %s21, 1
      %p206 = por %p204, %p205
      %p208 = scmp.ne.s32.totalorder %s191, %s207
      %p209 = scmp.eq.s32.totalorder %s21, 0
      %p210 = por %p208, %p209
      %p211 = scmp.le.s32.totalorder 1, %s15
      %p212 = scmp.lt.s32.totalorder %s15, 3
      %p213 = pnand %p211, %p212
      %p214 = pneg %p213
      // Predicated region
      $region9: #{attention_spd_forward.3} parent=5 // pred_check
        _
      $region10: #{attention_spd_forward.3} parent=5 // pred_check_branch
        %216 = sbr.rel (%p213) target = $region12
      $region11: #{attention_spd_forward.3} parent=5 // pred_region
        %s217 = ssub.s32 %s15, 1
        // Predicated region
        $region13: #{attention_spd_forward.3} parent=11 // pred_check
          %p218 = pneg %p133
        $region14: #{attention_spd_forward.3} parent=11 // pred_check_branch
          %220 = sbr.rel (%p218) target = $region16
        $region15: #{attention_spd_forward.3} parent=11 // pred_region
          %p221 = scmp.lt.s32.totalorder %s25, 0
          %s222 = scalar_select %p221, %s25, 0
          %s223 = smul.addr %s222, 8
          %s224 = scalar_lea.vmem %s3, %s223
        $region16: #{attention_spd_forward.3} parent=11 // pred_fallthru
          _
        // Predicated region
        $region17: #{attention_spd_forward.3} parent=11 // pred_check
          %p225 = pneg %p154
        $region18: #{attention_spd_forward.3} parent=11 // pred_check_branch
          %227 = sbr.rel (%p225) target = $region20
        $region19: #{attention_spd_forward.3} parent=11 // pred_region
          _
        $region20: #{attention_spd_forward.3} parent=11 // pred_fallthru
          _
        // Predicated region
        $region21: #{attention_spd_forward.3} parent=11 // pred_check
          %p228 = pneg %p175
        $region22: #{attention_spd_forward.3} parent=11 // pred_check_branch
          %230 = sbr.rel (%p228) target = $region24
        $region23: #{attention_spd_forward.3} parent=11 // pred_region
          _
        $region24: #{attention_spd_forward.3} parent=11 // pred_fallthru
          _
      $region12: #{attention_spd_forward.3} parent=5 // pred_fallthru
        _
      %p231 = scmp.lt.s32.totalorder %s15, 2
      // Predicated region
      $region25: #{attention_spd_forward.3} parent=5 // pred_check
        %p232 = pneg %p231
      $region26: #{attention_spd_forward.3} parent=5 // pred_check_branch
        %234 = sbr.rel (%p232) target = $region28
      $region27: #{attention_spd_forward.3} parent=5 // pred_region
        // Predicated region
        $region29: #{attention_spd_forward.3} parent=27 // pred_check
          %p235 = pneg %p49
        $region30: #{attention_spd_forward.3} parent=27 // pred_check_branch
          %237 = sbr.rel (%p235) target = $region32
        $region31: #{attention_spd_forward.3} parent=27 // pred_region
          %p238 = scmp.lt.s32.totalorder %s22, 1
          %s239 = scalar_select %p238, %s22, 1
          %p240 = scmp.lt.s32.totalorder %s23, 0
          %s241 = scalar_select %p240, %s23, 0
          %s242 = sadd.s32 %s241, %s239
          %s243 = smul.addr %s242, 4
          %s244 = scalar_lea.vmem %s0, %s243
        $region32: #{attention_spd_forward.3} parent=27 // pred_fallthru
          _
        // Predicated region
        $region33: #{attention_spd_forward.3} parent=27 // pred_check
          %p245 = pneg %p75
        $region34: #{attention_spd_forward.3} parent=27 // pred_check_branch
          %247 = sbr.rel (%p245) target = $region36
        $region35: #{attention_spd_forward.3} parent=27 // pred_region
          %p248 = scmp.lt.s32.totalorder %s22, 1
          %s249 = scalar_select %p248, %s22, 1
          %s250 = smul.addr %s249, 4
          %s251 = scalar_lea.vmem %s1, %s250
        $region36: #{attention_spd_forward.3} parent=27 // pred_fallthru
          _
        // Predicated region
        $region37: #{attention_spd_forward.3} parent=27 // pred_check
          %p252 = pneg %p101
        $region38: #{attention_spd_forward.3} parent=27 // pred_check_branch
          %254 = sbr.rel (%p252) target = $region40
        $region39: #{attention_spd_forward.3} parent=27 // pred_region
          %p255 = scmp.lt.s32.totalorder %s22, 1
          %s256 = scalar_select %p255, %s22, 1
          %s257 = smul.addr %s256, 4
          %s258 = scalar_lea.vmem %s2, %s257
        $region40: #{attention_spd_forward.3} parent=27 // pred_fallthru
          _
      $region28: #{attention_spd_forward.3} parent=5 // pred_fallthru
        _
      %p259 = scmp.le.s32.totalorder 1, %s15
      %p260 = scmp.lt.s32.totalorder %s15, 3
      %p261 = pnand %p259, %p260
      %p262 = pneg %p261
      // Predicated region
      $region41: #{attention_spd_forward.3} parent=5 // pred_check
        _
      $region42: #{attention_spd_forward.3} parent=5 // pred_check_branch
        %264 = sbr.rel (%p261) target = $region44
      $region43: #{attention_spd_forward.3} parent=5 // pred_region
        %s265 = ssub.s32 %s15, 1
        %p266 = scmp.lt.s32.totalorder %s24, 1
        %s267 = scalar_select %p266, %s24, 1
        %p268 = scmp.lt.s32.totalorder %s25, 0
        %s269 = scalar_select %p268, %s25, 0
        %s270 = sadd.s32 %s269, %s267
        %s271 = smul.addr %s270, 4
        %s272 = scalar_lea.vmem %s0, %s271
        %p273 = pneg %p55
        %p274 = pneg %p52
        %p275 = scmp.lt.s32.totalorder %s24, 1
        %s276 = scalar_select %p275, %s24, 1
        %s277 = smul.addr %s276, 4
        %s278 = scalar_lea.vmem %s1, %s277
        %p279 = pneg %p81
        %p280 = pneg %p78
        %p281 = scmp.lt.s32.totalorder %s24, 1
        %s282 = scalar_select %p281, %s24, 1
        %s283 = smul.addr %s282, 4
        %s284 = scalar_lea.vmem %s2, %s283
        %p285 = pneg %p107
        %p286 = pneg %p104
        %p287 = scmp.lt.s32.totalorder %s25, 0
        %s288 = scalar_select %p287, %s25, 0
        %s289 = smul.addr %s288, 8
        %s290 = scalar_lea.vmem %s3, %s289
        %p291 = pneg %p133
        %p292 = pneg %p130
        %p293 = pneg %p154
        %p294 = pneg %p151
        %p295 = pneg %p175
        %p296 = pneg %p172
        %p297 = pneg %p203
        %p298 = pneg %p200
        %s299 = sand.u32 %s190, 1
        %s300 = scalar_lea.sflag [#allocation3], %s299
        %s301 = sand.u32 %s190, 1
        %s302 = smul.addr %s301, 8
        %s303 = scalar_lea.vmem [#allocation2], %s302
        %p304 = scmp.lt.s32.totalorder %s24, 1
        %s305 = scalar_select %p304, %s24, 1
        %p306 = scmp.lt.s32.totalorder %s25, 0
        %s307 = scalar_select %p306, %s25, 0
        %s308 = sadd.s32 %s307, %s305
        %s309 = smul.addr %s308, 4
        %s310 = scalar_lea.vmem %s0, %s309
        %p311 = scmp.lt.s32.totalorder %s24, 1
        %s312 = scalar_select %p311, %s24, 1
        %s313 = smul.addr %s312, 4
        %s314 = scalar_lea.vmem %s1, %s313
        %p315 = scmp.lt.s32.totalorder %s24, 1
        %s316 = scalar_select %p315, %s24, 1
        %s317 = smul.addr %s316, 4
        %s318 = scalar_lea.vmem %s2, %s317
        %p319 = scmp.lt.s32.totalorder %s25, 0
        %s320 = scalar_select %p319, %s25, 0
        %s321 = smul.addr %s320, 8
        %s322 = scalar_lea.vmem %s3, %s321
        %v324 = vld [vmem:[%s310] sm:$0xf]
        %v325 = vld [vmem:[%s314] sm:$0xf]
        %v326 = vld [vmem:[%s318] sm:$0xf]
        %v327 = vld [vmem:[%s322] sm:$0xff]
        %vm328 = vcmask 130048
        %v330 = vsel %vm328, %v324, 0
        %v333 = vsel %vm328, %v325, 0
        %335 = vmatprep.subr.bf16.mxu0 0
        %336 = vmatpush1.bf16.xpose.msra.mxu0 %v333
        %337 = vmatprep.subr.bf16.mxu0 0
        %338 = vmatpush1.bf16.xpose.msra.mxu0 0
        %339 = vmatprep.subr.bf16.mxu0 0
        %340 = vmatpush1.bf16.xpose.msra.mxu0 0
        %341 = vmatprep.subr.bf16.mxu0 0
        %342 = vmatpush1.bf16.xpose.msra.mxu0 0
        %343 = vmatprep.subr.bf16.mxu0 0
        %344 = vmatpush1.bf16.xpose.msra.mxu0 0
        %345 = vmatprep.subr.bf16.mxu0 0
        %346 = vmatpush1.bf16.xpose.msra.mxu0 0
        %347 = vmatprep.subr.bf16.mxu0 0
        %348 = vmatpush1.bf16.xpose.msra.mxu0 0
        %349 = vmatprep.subr.bf16.mxu0 0
        %350 = vmatpush1.bf16.xpose.msra.mxu0 0
        %351 = vmatprep.subr.bf16.mxu0 0
        %352 = vmatpush1.bf16.xpose.msra.mxu0 0
        %353 = vmatprep.subr.bf16.mxu0 0
        %354 = vmatpush1.bf16.xpose.msra.mxu0 0
        %355 = vmatprep.subr.bf16.mxu0 0
        %356 = vmatpush1.bf16.xpose.msra.mxu0 0
        %357 = vmatprep.subr.bf16.mxu0 0
        %358 = vmatpush1.bf16.xpose.msra.mxu0 0
        %359 = vmatprep.subr.bf16.mxu0 0
        %360 = vmatpush1.bf16.xpose.msra.mxu0 0
        %361 = vmatprep.subr.bf16.mxu0 0
        %362 = vmatpush1.bf16.xpose.msra.mxu0 0
        %363 = vmatprep.subr.bf16.mxu0 0
        %364 = vmatpush1.bf16.xpose.msra.mxu0 0
        %365 = vmatprep.subr.bf16.mxu0 0
        %366 = vmatpush1.bf16.xpose.msra.mxu0 0
        %367 = vmatprep.mubr.bf16.mxu0 0
        %368 = vmatmul.mubr.bf16.gmra.mrb[0].mxu0 %v330
        %v369 = vpop.f32.mrb[0].mxu0
        %v370 = vadd.f32 0.0, %v369
        %v371 = vpop.f32.mrb[0].mxu0
        %v372 = vpop.f32.mrb[0].mxu0
        %v373 = vpop.f32.mrb[0].mxu0
        %374 = vdwg.mxu0
        %v375 = vmul.f32 %v370, %v370
        %vm376 = vcmask 64512
        %v377 = vsel %vm376, %v375, 0.0
        %378 = vadd.xlane.f32.xlu0 %v377
        %v379 = vpop.xlane.xlu0 %378
        %v380 = vrsqrt.pop %v379
        %v381 = vmul.f32 %v379, %v380
        %vm382 = vcmp.eq.f32.partialorder %v379, inf
        %v383 = vsel %vm382, %v379, %v381
        %vm384 = vcmp.eq.f32.partialorder %v379, 0.0
        %v385 = vand.u32 %v379, 2147483648
        %v386 = vsel %vm384, %v385, %v383
        %v387 = vmul.f32 %v370, %v327
        %v388 = vmul.f32 %v387, %v387
        %v389 = vsel %vm376, %v388, 0.0
        %390 = vadd.xlane.f32.xlu0 %v389
        %v391 = vpop.xlane.xlu0 %390
        %v392 = vmax.f32 %v391, 1e-24
        %v393 = vrsqrt.pop %v392
        %v394 = vmul.f32 %v393, %v386
        %v395 = vmul.f32 %v387, %v394
        %v396 = vadd.f32 %v370, %v395
        %v397 = vsel %vm376, %v396, -inf
        %398 = vmax.xlane.f32.xlu0 %v397
        %v399 = vpop.xlane.xlu0 %398
        %v400 = vsub.f32 %v396, %v399
        %v401 = vmul.f32 %v400, 1.442695
        %v402 = vpow.pop %v401
        %v403 = vsel %vm376, %v402, 0.0
        %404 = vadd.xlane.f32.xlu0 %v403
        %v405 = vpop.xlane.xlu0 %404
        %v406 = vrcp.pop %v405
        %v407 = vmul.f32 %v402, %v406
        %v408 = vpack.c.bf16 %v407, %v407
        %v410 = vsel %vm376, %v408, 0
        %vm412 = vcmask 1043456
        %v414 = vsel %vm412, %v326, 0
        %416 = vmatprep.subr.bf16.mxu0 0
        %417 = vmatpush1.bf16.msra.mxu0 %v414
        %418 = vmatprep.subr.bf16.mxu0 0
        %419 = vmatpush1.bf16.msra.mxu0 0
        %420 = vmatprep.subr.bf16.mxu0 0
        %421 = vmatpush1.bf16.msra.mxu0 0
        %422 = vmatprep.subr.bf16.mxu0 0
        %423 = vmatpush1.bf16.msra.mxu0 0
        %424 = vmatprep.subr.bf16.mxu0 0
        %425 = vmatpush1.bf16.msra.mxu0 0
        %426 = vmatprep.subr.bf16.mxu0 0
        %427 = vmatpush1.bf16.msra.mxu0 0
        %428 = vmatprep.subr.bf16.mxu0 0
        %429 = vmatpush1.bf16.msra.mxu0 0
        %430 = vmatprep.subr.bf16.mxu0 0
        %431 = vmatpush1.bf16.msra.mxu0 0
        %432 = vmatprep.subr.bf16.mxu0 0
        %433 = vmatpush1.bf16.msra.mxu0 0
        %434 = vmatprep.subr.bf16.mxu0 0
        %435 = vmatpush1.bf16.msra.mxu0 0
        %436 = vmatprep.subr.bf16.mxu0 0
        %437 = vmatpush1.bf16.msra.mxu0 0
        %438 = vmatprep.subr.bf16.mxu0 0
        %439 = vmatpush1.bf16.msra.mxu0 0
        %440 = vmatprep.subr.bf16.mxu0 0
        %441 = vmatpush1.bf16.msra.mxu0 0
        %442 = vmatprep.subr.bf16.mxu0 0
        %443 = vmatpush1.bf16.msra.mxu0 0
        %444 = vmatprep.subr.bf16.mxu0 0
        %445 = vmatpush1.bf16.msra.mxu0 0
        %446 = vmatprep.subr.bf16.mxu0 0
        %447 = vmatpush1.bf16.msra.mxu0 0
        %448 = vmatprep.mubr.bf16.mxu0 0
        %449 = vmatmul.mubr.bf16.gmra.mrb[0].mxu0 %v410
        %v450 = vpop.f32.mrb[0].mxu0
        %v451 = vadd.f32 0.0, %v450
        %v452 = vpop.f32.mrb[0].mxu0
        %v453 = vpop.f32.mrb[0].mxu0
        %v454 = vpop.f32.mrb[0].mxu0
        %455 = vdwg.mxu0
        %v456 = vpack.c.bf16 %v451, %v451
        %v457 = vld [vmem:[%s4] sm:$0xf]
        %v458 = vld [vmem:[%s4 + $0x4] sm:$0xf]
        %v460 = vunpack.c.l.b16 %v324
        %v461 = vpack.c.b16 %v460, %v460
        %462 = vrot.lane.b32.xlu0 %v461, 112
        %v463 = vpop.permute.xlu0 %462
        %v465 = vunpack.c.l.b16 %v325
        %v466 = vpack.c.b16 %v465, %v465
        %467 = vrot.lane.b32.xlu0 %v466, 112
        %v468 = vpop.permute.xlu0 %467
        %v470 = vsel %vm328, %v463, 0
        %v473 = vsel %vm328, %v468, 0
        %475 = vmatprep.subr.bf16.mxu0 0
        %476 = vmatpush1.bf16.xpose.msra.mxu0 %v473
        %477 = vmatprep.subr.bf16.mxu0 0
        %478 = vmatpush1.bf16.xpose.msra.mxu0 0
        %479 = vmatprep.subr.bf16.mxu0 0
        %480 = vmatpush1.bf16.xpose.msra.mxu0 0
        %481 = vmatprep.subr.bf16.mxu0 0
        %482 = vmatpush1.bf16.xpose.msra.mxu0 0
        %483 = vmatprep.subr.bf16.mxu0 0
        %484 = vmatpush1.bf16.xpose.msra.mxu0 0
        %485 = vmatprep.subr.bf16.mxu0 0
        %486 = vmatpush1.bf16.xpose.msra.mxu0 0
        %487 = vmatprep.subr.bf16.mxu0 0
        %488 = vmatpush1.bf16.xpose.msra.mxu0 0
        %489 = vmatprep.subr.bf16.mxu0 0
        %490 = vmatpush1.bf16.xpose.msra.mxu0 0
        %491 = vmatprep.subr.bf16.mxu0 0
        %492 = vmatpush1.bf16.xpose.msra.mxu0 0
        %493 = vmatprep.subr.bf16.mxu0 0
        %494 = vmatpush1.bf16.xpose.msra.mxu0 0
        %495 = vmatprep.subr.bf16.mxu0 0
        %496 = vmatpush1.bf16.xpose.msra.mxu0 0
        %497 = vmatprep.subr.bf16.mxu0 0
        %498 = vmatpush1.bf16.xpose.msra.mxu0 0
        %499 = vmatprep.subr.bf16.mxu0 0
        %500 = vmatpush1.bf16.xpose.msra.mxu0 0
        %501 = vmatprep.subr.bf16.mxu0 0
        %502 = vmatpush1.bf16.xpose.msra.mxu0 0
        %503 = vmatprep.subr.bf16.mxu0 0
        %504 = vmatpush1.bf16.xpose.msra.mxu0 0
        %505 = vmatprep.subr.bf16.mxu0 0
        %506 = vmatpush1.bf16.xpose.msra.mxu0 0
        %507 = vmatprep.mubr.bf16.mxu0 0
        %508 = vmatmul.mubr.bf16.gmra.mrb[0].mxu0 %v470
        %v509 = vpop.f32.mrb[0].mxu0
        %v510 = vadd.f32 0.0, %v509
        %v511 = vpop.f32.mrb[0].mxu0
        %v512 = vpop.f32.mrb[0].mxu0
        %v513 = vpop.f32.mrb[0].mxu0
        %514 = vdwg.mxu0
        %v515 = vmul.f32 %v510, %v510
        %v516 = vsel %vm376, %v515, 0.0
        %517 = vadd.xlane.f32.xlu0 %v516
        %v518 = vpop.xlane.xlu0 %517
        %v519 = vrsqrt.pop %v518
        %v520 = vmul.f32 %v518, %v519
        %vm521 = vcmp.eq.f32.partialorder %v518, inf
        %v522 = vsel %vm521, %v518, %v520
        %vm523 = vcmp.eq.f32.partialorder %v518, 0.0
        %v524 = vand.u32 %v518, 2147483648
        %v525 = vsel %vm523, %v524, %v522
        %v526 = vmul.f32 %v510, %v327
        %v527 = vmul.f32 %v526, %v526
        %v528 = vsel %vm376, %v527, 0.0
        %529 = vadd.xlane.f32.xlu0 %v528
        %v530 = vpop.xlane.xlu0 %529
        %v531 = vmax.f32 %v530, 1e-24
        %v532 = vrsqrt.pop %v531
        %v533 = vmul.f32 %v532, %v525
        %v534 = vmul.f32 %v526, %v533
        %v535 = vadd.f32 %v510, %v534
        %v536 = vsel %vm376, %v535, -inf
        %537 = vmax.xlane.f32.xlu0 %v536
        %v538 = vpop.xlane.xlu0 %537
        %v539 = vsub.f32 %v535, %v538
        %v540 = vmul.f32 %v539, 1.442695
        %v541 = vpow.pop %v540
        %v542 = vsel %vm376, %v541, 0.0
        %543 = vadd.xlane.f32.xlu0 %v542
        %v544 = vpop.xlane.xlu0 %543
        %v545 = vrcp.pop %v544
        %v546 = vmul.f32 %v541, %v545
        %v547 = vpack.c.bf16 %v546, %v546
        %v549 = vunpack.c.l.b16 %v326
        %v550 = vpack.c.b16 %v549, %v549
        %551 = vrot.lane.b32.xlu0 %v550, 112
        %v552 = vpop.permute.xlu0 %551
        %v554 = vsel %vm376, %v547, 0
        %v557 = vsel %vm412, %v552, 0
        %559 = vmatprep.subr.bf16.mxu0 0
        %560 = vmatpush1.bf16.msra.mxu0 %v557
        %561 = vmatprep.subr.bf16.mxu0 0
        %562 = vmatpush1.bf16.msra.mxu0 0
        %563 = vmatprep.subr.bf16.mxu0 0
        %564 = vmatpush1.bf16.msra.mxu0 0
        %565 = vmatprep.subr.bf16.mxu0 0
        %566 = vmatpush1.bf16.msra.mxu0 0
        %567 = vmatprep.subr.bf16.mxu0 0
        %568 = vmatpush1.bf16.msra.mxu0 0
        %569 = vmatprep.subr.bf16.mxu0 0
        %570 = vmatpush1.bf16.msra.mxu0 0
        %571 = vmatprep.subr.bf16.mxu0 0
        %572 = vmatpush1.bf16.msra.mxu0 0
        %573 = vmatprep.subr.bf16.mxu0 0
        %574 = vmatpush1.bf16.msra.mxu0 0
        %575 = vmatprep.subr.bf16.mxu0 0
        %576 = vmatpush1.bf16.msra.mxu0 0
        %577 = vmatprep.subr.bf16.mxu0 0
        %578 = vmatpush1.bf16.msra.mxu0 0
        %579 = vmatprep.subr.bf16.mxu0 0
        %580 = vmatpush1.bf16.msra.mxu0 0
        %581 = vmatprep.subr.bf16.mxu0 0
        %582 = vmatpush1.bf16.msra.mxu0 0
        %583 = vmatprep.subr.bf16.mxu0 0
        %584 = vmatpush1.bf16.msra.mxu0 0
        %585 = vmatprep.subr.bf16.mxu0 0
        %586 = vmatpush1.bf16.msra.mxu0 0
        %587 = vmatprep.subr.bf16.mxu0 0
        %588 = vmatpush1.bf16.msra.mxu0 0
        %589 = vmatprep.subr.bf16.mxu0 0
        %590 = vmatpush1.bf16.msra.mxu0 0
        %591 = vmatprep.mubr.bf16.mxu0 0
        %592 = vmatmul.mubr.bf16.gmra.mrb[0].mxu0 %v554
        %v593 = vpop.f32.mrb[0].mxu0
        %v594 = vadd.f32 0.0, %v593
        %v595 = vpop.f32.mrb[0].mxu0
        %v596 = vpop.f32.mrb[0].mxu0
        %v597 = vpop.f32.mrb[0].mxu0
        %598 = vdwg.mxu0
        %v599 = vpack.c.bf16 %v594, %v594
        %v600 = vld [vmem:[%s4 + $0x8] sm:$0xf]
        %v601 = vld [vmem:[%s4 + $0xc] sm:$0xf]
        %v604 = vunpack.c.l.b16 %v600
        %v605 = vunpack.c.l.b16 %v601
        %v606 = vpack.c.b16 %v605, %v604
        %v609 = vsel %vm328, %v599, 0
        %611 = vmatprep.subr.bf16.mxu0 0
        %612 = vmatpush1.bf16.msra.mxu0 %v606
        %613 = vmatprep.subr.bf16.mxu0 0
        %614 = vmatpush1.bf16.msra.mxu0 0
        %615 = vmatprep.subr.bf16.mxu0 0
        %616 = vmatpush1.bf16.msra.mxu0 0
        %617 = vmatprep.subr.bf16.mxu0 0
        %618 = vmatpush1.bf16.msra.mxu0 0
        %619 = vmatprep.subr.bf16.mxu0 0
        %620 = vmatpush1.bf16.msra.mxu0 0
        %621 = vmatprep.subr.bf16.mxu0 0
        %622 = vmatpush1.bf16.msra.mxu0 0
        %623 = vmatprep.subr.bf16.mxu0 0
        %624 = vmatpush1.bf16.msra.mxu0 0
        %625 = vmatprep.subr.bf16.mxu0 0
        %626 = vmatpush1.bf16.msra.mxu0 0
        %627 = vmatprep.subr.bf16.mxu0 0
        %628 = vmatpush1.bf16.msra.mxu0 0
        %629 = vmatprep.subr.bf16.mxu0 0
        %630 = vmatpush1.bf16.msra.mxu0 0
        %631 = vmatprep.subr.bf16.mxu0 0
        %632 = vmatpush1.bf16.msra.mxu0 0
        %633 = vmatprep.subr.bf16.mxu0 0
        %634 = vmatpush1.bf16.msra.mxu0 0
        %635 = vmatprep.subr.bf16.mxu0 0
        %636 = vmatpush1.bf16.msra.mxu0 0
        %637 = vmatprep.subr.bf16.mxu0 0
        %638 = vmatpush1.bf16.msra.mxu0 0
        %639 = vmatprep.subr.bf16.mxu0 0
        %640 = vmatpush1.bf16.msra.mxu0 0
        %641 = vmatprep.subr.bf16.mxu0 0
        %642 = vmatpush1.bf16.msra.mxu0 0
        %643 = vmatprep.mubr.bf16.mxu0 0
        %644 = vmatmul.mubr.bf16.gmra.mrb[0].mxu0 %v609
        %v645 = vpop.f32.mrb[0].mxu0
        %v646 = vadd.f32 0.0, %v645
        %v647 = vpop.f32.mrb[0].mxu0
        %v648 = vpop.f32.mrb[0].mxu0
        %v649 = vpop.f32.mrb[0].mxu0
        %650 = vdwg.mxu0
        %v653 = vunpack.c.l.b16 %v457
        %v654 = vunpack.c.l.b16 %v458
        %v655 = vpack.c.b16 %v654, %v653
        %v658 = vsel %vm328, %v456, 0
        %660 = vmatprep.subr.bf16.mxu0 0
        %661 = vmatpush1.bf16.msra.mxu0 %v655
        %662 = vmatprep.subr.bf16.mxu0 0
        %663 = vmatpush1.bf16.msra.mxu0 0
        %664 = vmatprep.subr.bf16.mxu0 0
        %665 = vmatpush1.bf16.msra.mxu0 0
        %666 = vmatprep.subr.bf16.mxu0 0
        %667 = vmatpush1.bf16.msra.mxu0 0
        %668 = vmatprep.subr.bf16.mxu0 0
        %669 = vmatpush1.bf16.msra.mxu0 0
        %670 = vmatprep.subr.bf16.mxu0 0
        %671 = vmatpush1.bf16.msra.mxu0 0
        %672 = vmatprep.subr.bf16.mxu0 0
        %673 = vmatpush1.bf16.msra.mxu0 0
        %674 = vmatprep.subr.bf16.mxu0 0
        %675 = vmatpush1.bf16.msra.mxu0 0
        %676 = vmatprep.subr.bf16.mxu0 0
        %677 = vmatpush1.bf16.msra.mxu0 0
        %678 = vmatprep.subr.bf16.mxu0 0
        %679 = vmatpush1.bf16.msra.mxu0 0
        %680 = vmatprep.subr.bf16.mxu0 0
        %681 = vmatpush1.bf16.msra.mxu0 0
        %682 = vmatprep.subr.bf16.mxu0 0
        %683 = vmatpush1.bf16.msra.mxu0 0
        %684 = vmatprep.subr.bf16.mxu0 0
        %685 = vmatpush1.bf16.msra.mxu0 0
        %686 = vmatprep.subr.bf16.mxu0 0
        %687 = vmatpush1.bf16.msra.mxu0 0
        %688 = vmatprep.subr.bf16.mxu0 0
        %689 = vmatpush1.bf16.msra.mxu0 0
        %690 = vmatprep.subr.bf16.mxu0 0
        %691 = vmatpush1.bf16.msra.mxu0 0
        %692 = vmatprep.mubr.bf16.mxu0 0
        %693 = vmatmul.mubr.bf16.gmra.mrb[0].mxu0 %v658
        %v694 = vpop.f32.mrb[0].mxu0
        %v695 = vadd.f32 %v646, %v694
        %v696 = vpop.f32.mrb[0].mxu0
        %v697 = vpop.f32.mrb[0].mxu0
        %v698 = vpop.f32.mrb[0].mxu0
        %699 = vdwg.mxu0
        %700 = vrot.lane.b32.xlu0 %v461, 96
        %v701 = vpop.permute.xlu0 %700
        %702 = vrot.lane.b32.xlu0 %v466, 96
        %v703 = vpop.permute.xlu0 %702
        %v705 = vsel %vm328, %v701, 0
        %v708 = vsel %vm328, %v703, 0
        %710 = vmatprep.subr.bf16.mxu0 0
        %711 = vmatpush1.bf16.xpose.msra.mxu0 %v708
        %712 = vmatprep.subr.bf16.mxu0 0
        %713 = vmatpush1.bf16.xpose.msra.mxu0 0
        %714 = vmatprep.subr.bf16.mxu0 0
        %715 = vmatpush1.bf16.xpose.msra.mxu0 0
        %716 = vmatprep.subr.bf16.mxu0 0
        %717 = vmatpush1.bf16.xpose.msra.mxu0 0
        %718 = vmatprep.subr.bf16.mxu0 0
        %719 = vmatpush1.bf16.xpose.msra.mxu0 0
        %720 = vmatprep.subr.bf16.mxu0 0
        %721 = vmatpush1.bf16.xpose.msra.mxu0 0
        %722 = vmatprep.subr.bf16.mxu0 0
        %723 = vmatpush1.bf16.xpose.msra.mxu0 0
        %724 = vmatprep.subr.bf16.mxu0 0
        %725 = vmatpush1.bf16.xpose.msra.mxu0 0
        %726 = vmatprep.subr.bf16.mxu0 0
        %727 = vmatpush1.bf16.xpose.msra.mxu0 0
        %728 = vmatprep.subr.bf16.mxu0 0
        %729 = vmatpush1.bf16.xpose.msra.mxu0 0
        %730 = vmatprep.subr.bf16.mxu0 0
        %731 = vmatpush1.bf16.xpose.msra.mxu0 0
        %732 = vmatprep.subr.bf16.mxu0 0
        %733 = vmatpush1.bf16.xpose.msra.mxu0 0
        %734 = vmatprep.subr.bf16.mxu0 0
        %735 = vmatpush1.bf16.xpose.msra.mxu0 0
        %736 = vmatprep.subr.bf16.mxu0 0
        %737 = vmatpush1.bf16.xpose.msra.mxu0 0
        %738 = vmatprep.subr.bf16.mxu0 0
        %739 = vmatpush1.bf16.xpose.msra.mxu0 0
        %740 = vmatprep.subr.bf16.mxu0 0
        %741 = vmatpush1.bf16.xpose.msra.mxu0 0
        %742 = vmatprep.mubr.bf16.mxu0 0
        %743 = vmatmul.mubr.bf16.gmra.mrb[0].mxu0 %v705
        %v744 = vpop.f32.mrb[0].mxu0
        %v745 = vadd.f32 0.0, %v744
        %v746 = vpop.f32.mrb[0].mxu0
        %v747 = vpop.f32.mrb[0].mxu0
        %v748 = vpop.f32.mrb[0].mxu0
        %749 = vdwg.mxu0
        %v750 = vmul.f32 %v745, %v745
        %v751 = vsel %vm376, %v750, 0.0
        %752 = vadd.xlane.f32.xlu0 %v751
        %v753 = vpop.xlane.xlu0 %752
        %v754 = vrsqrt.pop %v753
        %v755 = vmul.f32 %v753, %v754
        %vm756 = vcmp.eq.f32.partialorder %v753, inf
        %v757 = vsel %vm756, %v753, %v755
        %vm758 = vcmp.eq.f32.partialorder %v753, 0.0
        %v759 = vand.u32 %v753, 2147483648
        %v760 = vsel %vm758, %v759, %v757
        %v761 = vmul.f32 %v745, %v327
        %v762 = vmul.f32 %v761, %v761
        %v763 = vsel %vm376, %v762, 0.0
        %764 = vadd.xlane.f32.xlu0 %v763
        %v765 = vpop.xlane.xlu0 %764
        %v766 = vmax.f32 %v765, 1e-24
        %v767 = vrsqrt.pop %v766
        %v768 = vmul.f32 %v767, %v760
        %v769 = vmul.f32 %v761, %v768
        %v770 = vadd.f32 %v745, %v769
        %v771 = vsel %vm376, %v770, -inf
        %772 = vmax.xlane.f32.xlu0 %v771
        %v773 = vpop.xlane.xlu0 %772
        %v774 = vsub.f32 %v770, %v773
        %v775 = vmul.f32 %v774, 1.442695
        %v776 = vpow.pop %v775
        %v777 = vsel %vm376, %v776, 0.0
        %778 = vadd.xlane.f32.xlu0 %v777
        %v779 = vpop.xlane.xlu0 %778
        %v780 = vrcp.pop %v779
        %v781 = vmul.f32 %v776, %v780
        %v782 = vpack.c.bf16 %v781, %v781
        %783 = vrot.lane.b32.xlu0 %v550, 96
        %v784 = vpop.permute.xlu0 %783
        %v786 = vsel %vm376, %v782, 0
        %v789 = vsel %vm412, %v784, 0
        %791 = vmatprep.subr.bf16.mxu0 0
        %792 = vmatpush1.bf16.msra.mxu0 %v789
        %793 = vmatprep.subr.bf16.mxu0 0
        %794 = vmatpush1.bf16.msra.mxu0 0
        %795 = vmatprep.subr.bf16.mxu0 0
        %796 = vmatpush1.bf16.msra.mxu0 0
        %797 = vmatprep.subr.bf16.mxu0 0
        %798 = vmatpush1.bf16.msra.mxu0 0
        %799 = vmatprep.subr.bf16.mxu0 0
        %800 = vmatpush1.bf16.msra.mxu0 0
        %801 = vmatprep.subr.bf16.mxu0 0
        %802 = vmatpush1.bf16.msra.mxu0 0
        %803 = vmatprep.subr.bf16.mxu0 0
        %804 = vmatpush1.bf16.msra.mxu0 0
        %805 = vmatprep.subr.bf16.mxu0 0
        %806 = vmatpush1.bf16.msra.mxu0 0
        %807 = vmatprep.subr.bf16.mxu0 0
        %808 = vmatpush1.bf16.msra.mxu0 0
        %809 = vmatprep.subr.bf16.mxu0 0
        %810 = vmatpush1.bf16.msra.mxu0 0
        %811 = vmatprep.subr.bf16.mxu0 0
        %812 = vmatpush1.bf16.msra.mxu0 0
        %813 = vmatprep.subr.bf16.mxu0 0
        %814 = vmatpush1.bf16.msra.mxu0 0
        %815 = vmatprep.subr.bf16.mxu0 0
        %816 = vmatpush1.bf16.msra.mxu0 0
        %817 = vmatprep.subr.bf16.mxu0 0
        %818 = vmatpush1.bf16.msra.mxu0 0
        %819 = vmatprep.subr.bf16.mxu0 0
        %820 = vmatpush1.bf16.msra.mxu0 0
        %821 = vmatprep.subr.bf16.mxu0 0
        %822 = vmatpush1.bf16.msra.mxu0 0
        %823 = vmatprep.mubr.bf16.mxu0 0
        %824 = vmatmul.mubr.bf16.gmra.mrb[0].mxu0 %v786
        %v825 = vpop.f32.mrb[0].mxu0
        %v826 = vadd.f32 0.0, %v825
        %v827 = vpop.f32.mrb[0].mxu0
        %v828 = vpop.f32.mrb[0].mxu0
        %v829 = vpop.f32.mrb[0].mxu0
        %830 = vdwg.mxu0
        %v831 = vpack.c.bf16 %v826, %v826
        %v832 = vld [vmem:[%s4 + $0x10] sm:$0xf]
        %v833 = vld [vmem:[%s4 + $0x14] sm:$0xf]
        %v836 = vunpack.c.l.b16 %v832
        %v837 = vunpack.c.l.b16 %v833
        %v838 = vpack.c.b16 %v837, %v836
        %v841 = vsel %vm328, %v831, 0
        %843 = vmatprep.subr.bf16.mxu0 0
        %844 = vmatpush1.bf16.msra.mxu0 %v838
        %845 = vmatprep.subr.bf16.mxu0 0
        %846 = vmatpush1.bf16.msra.mxu0 0
        %847 = vmatprep.subr.bf16.mxu0 0
        %848 = vmatpush1.bf16.msra.mxu0 0
        %849 = vmatprep.subr.bf16.mxu0 0
        %850 = vmatpush1.bf16.msra.mxu0 0
        %851 = vmatprep.subr.bf16.mxu0 0
        %852 = vmatpush1.bf16.msra.mxu0 0
        %853 = vmatprep.subr.bf16.mxu0 0
        %854 = vmatpush1.bf16.msra.mxu0 0
        %855 = vmatprep.subr.bf16.mxu0 0
        %856 = vmatpush1.bf16.msra.mxu0 0
        %857 = vmatprep.subr.bf16.mxu0 0
        %858 = vmatpush1.bf16.msra.mxu0 0
        %859 = vmatprep.subr.bf16.mxu0 0
        %860 = vmatpush1.bf16.msra.mxu0 0
        %861 = vmatprep.subr.bf16.mxu0 0
        %862 = vmatpush1.bf16.msra.mxu0 0
        %863 = vmatprep.subr.bf16.mxu0 0
        %864 = vmatpush1.bf16.msra.mxu0 0
        %865 = vmatprep.subr.bf16.mxu0 0
        %866 = vmatpush1.bf16.msra.mxu0 0
        %867 = vmatprep.subr.bf16.mxu0 0
        %868 = vmatpush1.bf16.msra.mxu0 0
        %869 = vmatprep.subr.bf16.mxu0 0
        %870 = vmatpush1.bf16.msra.mxu0 0
        %871 = vmatprep.subr.bf16.mxu0 0
        %872 = vmatpush1.bf16.msra.mxu0 0
        %873 = vmatprep.subr.bf16.mxu0 0
        %874 = vmatpush1.bf16.msra.mxu0 0
        %875 = vmatprep.mubr.bf16.mxu0 0
        %876 = vmatmul.mubr.bf16.gmra.mrb[0].mxu0 %v841
        %v877 = vpop.f32.mrb[0].mxu0
        %v878 = vadd.f32 0.0, %v877
        %v879 = vpop.f32.mrb[0].mxu0
        %v880 = vpop.f32.mrb[0].mxu0
        %v881 = vpop.f32.mrb[0].mxu0
        %882 = vdwg.mxu0
        %v883 = vadd.f32 %v695, %v878
        %884 = vrot.lane.b32.xlu0 %v461, 80
        %v885 = vpop.permute.xlu0 %884
        %886 = vrot.lane.b32.xlu0 %v466, 80
        %v887 = vpop.permute.xlu0 %886
        %v889 = vsel %vm328, %v885, 0
        %v892 = vsel %vm328, %v887, 0
        %894 = vmatprep.subr.bf16.mxu0 0
        %895 = vmatpush1.bf16.xpose.msra.mxu0 %v892
        %896 = vmatprep.subr.bf16.mxu0 0
        %897 = vmatpush1.bf16.xpose.msra.mxu0 0
        %898 = vmatprep.subr.bf16.mxu0 0
        %899 = vmatpush1.bf16.xpose.msra.mxu0 0
        %900 = vmatprep.subr.bf16.mxu0 0
        %901 = vmatpush1.bf16.xpose.msra.mxu0 0
        %902 = vmatprep.subr.bf16.mxu0 0
        %903 = vmatpush1.bf16.xpose.msra.mxu0 0
        %904 = vmatprep.subr.bf16.mxu0 0
        %905 = vmatpush1.bf16.xpose.msra.mxu0 0
        %906 = vmatprep.subr.bf16.mxu0 0
        %907 = vmatpush1.bf16.xpose.msra.mxu0 0
        %908 = vmatprep.subr.bf16.mxu0 0
        %909 = vmatpush1.bf16.xpose.msra.mxu0 0
        %910 = vmatprep.subr.bf16.mxu0 0
        %911 = vmatpush1.bf16.xpose.msra.mxu0 0
        %912 = vmatprep.subr.bf16.mxu0 0
        %913 = vmatpush1.bf16.xpose.msra.mxu0 0
        %914 = vmatprep.subr.bf16.mxu0 0
        %915 = vmatpush1.bf16.xpose.msra.mxu0 0
        %916 = vmatprep.subr.bf16.mxu0 0
        %917 = vmatpush1.bf16.xpose.msra.mxu0 0
        %918 = vmatprep.subr.bf16.mxu0 0
        %919 = vmatpush1.bf16.xpose.msra.mxu0 0
        %920 = vmatprep.subr.bf16.mxu0 0
        %921 = vmatpush1.bf16.xpose.msra.mxu0 0
        %922 = vmatprep.subr.bf16.mxu0 0
        %923 = vmatpush1.bf16.xpose.msra.mxu0 0
        %924 = vmatprep.subr.bf16.mxu0 0
        %925 = vmatpush1.bf16.xpose.msra.mxu0 0
        %926 = vmatprep.mubr.bf16.mxu0 0
        %927 = vmatmul.mubr.bf16.gmra.mrb[0].mxu0 %v889
        %v928 = vpop.f32.mrb[0].mxu0
        %v929 = vadd.f32 0.0, %v928
        %v930 = vpop.f32.mrb[0].mxu0
        %v931 = vpop.f32.mrb[0].mxu0
        %v932 = vpop.f32.mrb[0].mxu0
        %933 = vdwg.mxu0
        %v934 = vmul.f32 %v929, %v929
        %v935 = vsel %vm376, %v934, 0.0
        %936 = vadd.xlane.f32.xlu0 %v935
        %v937 = vpop.xlane.xlu0 %936
        %v938 = vrsqrt.pop %v937
        %v939 = vmul.f32 %v937, %v938
        %vm940 = vcmp.eq.f32.partialorder %v937, inf
        %v941 = vsel %vm940, %v937, %v939
        %vm942 = vcmp.eq.f32.partialorder %v937, 0.0
        %v943 = vand.u32 %v937, 2147483648
        %v944 = vsel %vm942, %v943, %v941
        %v945 = vmul.f32 %v929, %v327
        %v946 = vmul.f32 %v945, %v945
        %v947 = vsel %vm376, %v946, 0.0
        %948 = vadd.xlane.f32.xlu0 %v947
        %v949 = vpop.xlane.xlu0 %948
        %v950 = vmax.f32 %v949, 1e-24
        %v951 = vrsqrt.pop %v950
        %v952 = vmul.f32 %v951, %v944
        %v953 = vmul.f32 %v945, %v952
        %v954 = vadd.f32 %v929, %v953
        %v955 = vsel %vm376, %v954, -inf
        %956 = vmax.xlane.f32.xlu0 %v955
        %v957 = vpop.xlane.xlu0 %956
        %v958 = vsub.f32 %v954, %v957
        %v959 = vmul.f32 %v958, 1.442695
        %v960 = vpow.pop %v959
        %v961 = vsel %vm376, %v960, 0.0
        %962 = vadd.xlane.f32.xlu0 %v961
        %v963 = vpop.xlane.xlu0 %962
        %v964 = vrcp.pop %v963
        %v965 = vmul.f32 %v960, %v964
        %v966 = vpack.c.bf16 %v965, %v965
        %967 = vrot.lane.b32.xlu0 %v550, 80
        %v968 = vpop.permute.xlu0 %967
        %v970 = vsel %vm376, %v966, 0
        %v973 = vsel %vm412, %v968, 0
        %975 = vmatprep.subr.bf16.mxu0 0
        %976 = vmatpush1.bf16.msra.mxu0 %v973
        %977 = vmatprep.subr.bf16.mxu0 0
        %978 = vmatpush1.bf16.msra.mxu0 0
        %979 = vmatprep.subr.bf16.mxu0 0
        %980 = vmatpush1.bf16.msra.mxu0 0
        %981 = vmatprep.subr.bf16.mxu0 0
        %982 = vmatpush1.bf16.msra.mxu0 0
        %983 = vmatprep.subr.bf16.mxu0 0
        %984 = vmatpush1.bf16.msra.mxu0 0
        %985 = vmatprep.subr.bf16.mxu0 0
        %986 = vmatpush1.bf16.msra.mxu0 0
        %987 = vmatprep.subr.bf16.mxu0 0
        %988 = vmatpush1.bf16.msra.mxu0 0
        %989 = vmatprep.subr.bf16.mxu0 0
        %990 = vmatpush1.bf16.msra.mxu0 0
        %991 = vmatprep.subr.bf16.mxu0 0
        %992 = vmatpush1.bf16.msra.mxu0 0
        %993 = vmatprep.subr.bf16.mxu0 0
        %994 = vmatpush1.bf16.msra.mxu0 0
        %995 = vmatprep.subr.bf16.mxu0 0
        %996 = vmatpush1.bf16.msra.mxu0 0
        %997 = vmatprep.subr.bf16.mxu0 0
        %998 = vmatpush1.bf16.msra.mxu0 0
        %999 = vmatprep.subr.bf16.mxu0 0
        %1000 = vmatpush1.bf16.msra.mxu0 0
        %1001 = vmatprep.subr.bf16.mxu0 0
        %1002 = vmatpush1.bf16.msra.mxu0 0
        %1003 = vmatprep.subr.bf16.mxu0 0
        %1004 = vmatpush1.bf16.msra.mxu0 0
        %1005 = vmatprep.subr.bf16.mxu0 0
        %1006 = vmatpush1.bf16.msra.mxu0 0
        %1007 = vmatprep.mubr.bf16.mxu0 0
        %1008 = vmatmul.mubr.bf16.gmra.mrb[0].mxu0 %v970
        %v1009 = vpop.f32.mrb[0].mxu0
        %v1010 = vadd.f32 0.0, %v1009
        %v1011 = vpop.f32.mrb[0].mxu0
        %v1012 = vpop.f32.mrb[0].mxu0
        %v1013 = vpop.f32.mrb[0].mxu0
        %1014 = vdwg.mxu0
        %v1015 = vpack.c.bf16 %v1010, %v1010
        %v1016 = vld [vmem:[%s4 + $0x18] sm:$0xf]
        %v1017 = vld [vmem:[%s4 + $0x1c] sm:$0xf]
        %v1020 = vunpack.c.l.b16 %v1016
        %v1021 = vunpack.c.l.b16 %v1017
        %v1022 = vpack.c.b16 %v1021, %v1020
        %v1025 = vsel %vm328, %v1015, 0
        %1027 = vmatprep.subr.bf16.mxu0 0
        %1028 = vmatpush1.bf16.msra.mxu0 %v1022
        %1029 = vmatprep.subr.bf16.mxu0 0
        %1030 = vmatpush1.bf16.msra.mxu0 0
        %1031 = vmatprep.subr.bf16.mxu0 0
        %1032 = vmatpush1.bf16.msra.mxu0 0
        %1033 = vmatprep.subr.bf16.mxu0 0
        %1034 = vmatpush1.bf16.msra.mxu0 0
        %1035 = vmatprep.subr.bf16.mxu0 0
        %1036 = vmatpush1.bf16.msra.mxu0 0
        %1037 = vmatprep.subr.bf16.mxu0 0
        %1038 = vmatpush1.bf16.msra.mxu0 0
        %1039 = vmatprep.subr.bf16.mxu0 0
        %1040 = vmatpush1.bf16.msra.mxu0 0
        %1041 = vmatprep.subr.bf16.mxu0 0
        %1042 = vmatpush1.bf16.msra.mxu0 0
        %1043 = vmatprep.subr.bf16.mxu0 0
        %1044 = vmatpush1.bf16.msra.mxu0 0
        %1045 = vmatprep.subr.bf16.mxu0 0
        %1046 = vmatpush1.bf16.msra.mxu0 0
        %1047 = vmatprep.subr.bf16.mxu0 0
        %1048 = vmatpush1.bf16.msra.mxu0 0
        %1049 = vmatprep.subr.bf16.mxu0 0
        %1050 = vmatpush1.bf16.msra.mxu0 0
        %1051 = vmatprep.subr.bf16.mxu0 0
        %1052 = vmatpush1.bf16.msra.mxu0 0
        %1053 = vmatprep.subr.bf16.mxu0 0
        %1054 = vmatpush1.bf16.msra.mxu0 0
        %1055 = vmatprep.subr.bf16.mxu0 0
        %1056 = vmatpush1.bf16.msra.mxu0 0
        %1057 = vmatprep.subr.bf16.mxu0 0
        %1058 = vmatpush1.bf16.msra.mxu0 0
        %1059 = vmatprep.mubr.bf16.mxu0 0
        %1060 = vmatmul.mubr.bf16.gmra.mrb[0].mxu0 %v1025
        %v1061 = vpop.f32.mrb[0].mxu0
        %v1062 = vadd.f32 0.0, %v1061
        %v1063 = vpop.f32.mrb[0].mxu0
        %v1064 = vpop.f32.mrb[0].mxu0
        %v1065 = vpop.f32.mrb[0].mxu0
        %1066 = vdwg.mxu0
        %v1067 = vadd.f32 %v883, %v1062
        %v1068 = vld [vmem:[%s5] sm:$0x1]
        %v1070 = vlaneseq
        %v1071 = vshrl.u32 %v1070, 7
        %v1072 = vsub.s32 0, %v1071
        %v1073 = vrot.slane %v1068, %v1072
        %v1075 = vadd.f32 %v1067, %v1073
        %vm1076 = vcmask 261120
        %1077 = vst.msk [vmem:[%s303] sm:$0xff] %vm1076, %v1075
        %s1078 = sand.u32 %s190, 1
        %s1079 = scalar_lea.sflag [#allocation3], %s1078
        %s1080 = sand.u32 %s190, 1
        %s1081 = smul.addr %s1080, 8
        %s1082 = scalar_lea.vmem [#allocation2], %s1081
        // Predicated region
        $region45: #{attention_spd_forward.3} parent=43 // pred_check
          %p1083 = pneg %p200
        $region46: #{attention_spd_forward.3} parent=43 // pred_check_branch
          %1085 = sbr.rel (%p1083) target = $region48
        $region47: #{attention_spd_forward.3} parent=43 // pred_region
          %s1087 = ssub.s32 128, 128
          %1088 = vsyncadd %s1079, %s1087
          %s1089 = sadd.s32 %s25, %s24
          %s1090 = smul.addr %s1089, 128
          %s1091 = scalar_lea.hbm %s6, %s1090
          %s1093 = sshll.u32 %s1082, 4
          %s1094 = int_to_ptr.vmem [resolvable:$true] %s1093
          %1096 = dma.vmem_to_hbm [thread:$0]  %s1094, 128, %s1091, %s1079
        $region48: #{attention_spd_forward.3} parent=43 // pred_fallthru
          _
      $region44: #{attention_spd_forward.3} parent=5 // pred_fallthru
        _
      %p1097 = scmp.le.s32.totalorder 2, %s15
      // Predicated region
      $region49: #{attention_spd_forward.3} parent=5 // pred_check
        %p1098 = pneg %p1097
      $region50: #{attention_spd_forward.3} parent=5 // pred_check_branch
        %1100 = sbr.rel (%p1098) target = $region52
      $region51: #{attention_spd_forward.3} parent=5 // pred_region
        %s1101 = ssub.s32 %s15, 2
        // Predicated region
        $region53: #{attention_spd_forward.3} parent=51 // pred_check
          %p1102 = pneg %p206
        $region54: #{attention_spd_forward.3} parent=51 // pred_check_branch
          %1104 = sbr.rel (%p1102) target = $region56
        $region55: #{attention_spd_forward.3} parent=51 // pred_region
          %s1105 = sand.u32 %s191, 1
          %s1106 = scalar_lea.sflag [#allocation3], %s1105
          %s1107 = sand.u32 %s191, 1
          %s1108 = smul.addr %s1107, 8
          %s1109 = scalar_lea.vmem [#allocation2], %s1108
          %1110 = dma.done %s1106, 128
        $region56: #{attention_spd_forward.3} parent=51 // pred_fallthru
          _
      $region52: #{attention_spd_forward.3} parent=5 // pred_fallthru
        _
    $region6: #{attention_spd_forward.3} parent=1 // loop_footer
      %s19 = sadd.s32 1, %s15
    $region7: #{attention_spd_forward.3} parent=1 // loop_footer_branch
      %14 = sbr.rel target = $region3
    $region8: #{attention_spd_forward.3} parent=1 // loop_exit
      _
    %1111 = vsyncpa [#allocation3], 1
    %s1112 = scalar_lea.sflag [#allocation3], 1
    %1113 = vsyncpa %s1112, 1

</llo_original>
